<compile_context>
chip_gen: v7x
topology: tpu7x:2x2x1
jax: 0.10.0
libtpu: 0.0.40
codegen_flags: <defaults>
</compile_context>

<pallas_src>
import functools

import jax
import jax.numpy as jnp
from jax.experimental import pallas as pl
from jax.experimental.pallas import tpu as pltpu

_EPS = 1e-5


# ----------------------------------- kernel -----------------------------------

def _projnet_kernel(x_ref, m_ref, w1_ref, w2_ref, out_ref, *, t_blocks, c, n, h, w):
    """Whole Projnet forward in one invocation.

    x_ref   : VMEM (C, N*H*W)        input activation (lane-dense layout)
    m_ref   : VMEM (9, N*H*W)        boundary-validity masks for the 9 taps
    w1_ref  : VMEM (T, C, 9*C+1)     conv1 weight, BN1 scale folded, bias column
    w2_ref  : VMEM (T, C, 9*C+1)     conv2 weight, BN2 scale folded, bias column
    out_ref : VMEM (C, N*H*W)        final `dual`
    """
    nhw = n * h * w
    masks = m_ref[...]                                  # (9, nhw), loop-invariant
    ones_row = jnp.ones((1, nhw), jnp.float32)          # bias "tap"

    def stacked_taps(a):
        # (9*C + 1, N*H*W): 9 shifted+masked copies of `a` plus a ones row.
        # shift_k(a)[ci, p] = a[ci, p + off_k]; mask zeroes out-of-image taps,
        # so rolls never leak across image (batch) boundaries.
        pieces = []
        for k in range(9):
            ddy, ddx = k // 3 - 1, k % 3 - 1
            off = ddy * w + ddx
            if off == 0:
                pieces.append(a)
            else:
                rolled = pltpu.roll(a, shift=(-off) % nhw, axis=1)
                pieces.append(rolled * masks[k:k + 1, :])
        pieces.append(ones_row)
        return jnp.concatenate(pieces, axis=0)          # (9c+1, nhw)

    def block(t, dual):
        w1 = w1_ref[t]                                  # (c, 9c+1)
        w2 = w2_ref[t]
        # conv1 (+ folded BN1 + bias) + ReLU  -- single MXU matmul (DEFAULT prec)
        z = jnp.dot(w1, stacked_taps(dual), preferred_element_type=jnp.float32)
        z = jnp.maximum(z, 0.0)
        # conv2 (+ folded BN2 + bias) + residual + ReLU
        y = jnp.dot(w2, stacked_taps(z), preferred_element_type=jnp.float32)
        return jnp.maximum(dual + y, 0.0)

    out_ref[...] = jax.lax.fori_loop(0, t_blocks, block, x_ref[...], unroll=True)


# ------------------------------ parameter packing ------------------------------

def _fold_bn(gamma, beta, mean, var, conv_bias):
    scale = gamma / jnp.sqrt(var + _EPS)
    bias = beta + (conv_bias - mean) * scale
    return scale, bias


def _pack_weight(wconv, scale, bias):
    """(C,C,3,3) OIHW conv weight + folded BN scale/bias ->
    (C, 9*C+1) matrix acting on the stacked tap matrix (last col = bias)."""
    c = wconv.shape[0]
    wk = jnp.transpose(wconv, (2, 3, 0, 1)).reshape(9, c, c)   # [k, co, ci]
    wk = wk * scale[None, :, None]                             # fold BN scale
    wmat = jnp.transpose(wk, (1, 0, 2)).reshape(c, 9 * c)      # [co, k*c + ci]
    return jnp.concatenate([wmat, bias[:, None]], axis=1)      # (c, 9c+1)


def _boundary_masks(n, h, w):
    """(9, N*H*W) validity masks for the 9 conv taps on the flattened images."""
    hw = h * w
    p = jnp.arange(n * hw) % hw
    yy, xx = p // w, p % w
    rows = []
    for k in range(9):
        ddy, ddx = k // 3 - 1, k % 3 - 1
        valid = ((yy + ddy >= 0) & (yy + ddy < h) &
                 (xx + ddx >= 0) & (xx + ddx < w))
        rows.append(valid.astype(jnp.float32))
    return jnp.stack(rows)                                     # (9, n*h*w)


# ----------------------------------- wrapper -----------------------------------

@jax.jit
def projnet_forward(x_nchw, params):
    """Projnet.forward: all T residual blocks in one fused pallas_call.

    params: list of per-block tuples
      (w1, b1, g1, beta1, mean1, var1, w2, b2, g2, beta2, mean2, var2)
    """
    n, c, h, w = x_nchw.shape
    nhw = n * h * w
    t_blocks = len(params)
    # Lane-dense layout requirement (see review generalization guard).
    assert nhw % 128 == 0, "flattened spatial axis must be a multiple of 128"

    w1s, w2s = [], []
    for (w1, cb1, g1, be1, mu1, v1, w2, cb2, g2, be2, mu2, v2) in params:
        s1, o1 = _fold_bn(g1, be1, mu1, v1, cb1)
        s2, o2 = _fold_bn(g2, be2, mu2, v2, cb2)
        w1s.append(_pack_weight(w1, s1, o1))
        w2s.append(_pack_weight(w2, s2, o2))
    w1_all = jnp.stack(w1s)                              # (T, C, 9C+1)
    w2_all = jnp.stack(w2s)
    masks = _boundary_masks(n, h, w)                     # (9, N*H*W)

    # (C, N*H*W) lane-dense layout: dense weights, 512-wide rows.
    x2d = jnp.transpose(x_nchw.astype(jnp.float32), (1, 0, 2, 3)).reshape(c, nhw)

    kernel = functools.partial(_projnet_kernel,
                               t_blocks=t_blocks, c=c, n=n, h=h, w=w)
    out2d = pl.pallas_call(
        kernel,
        out_shape=jax.ShapeDtypeStruct((c, nhw), jnp.float32),
        in_specs=[pl.BlockSpec(memory_space=pltpu.MemorySpace.VMEM)] * 4,
        out_specs=pl.BlockSpec(memory_space=pltpu.MemorySpace.VMEM),
    )(x2d, masks, w1_all, w2_all)

    return jnp.transpose(out2d.reshape(c, n, h, w), (1, 0, 2, 3))


# ----------------------------------- reference -----------------------------------

def _reference_forward(x, raw_params):
    """Pure-JAX reference matching the PyTorch module (BN in eval mode)."""
    def bn(z, g, b, m, v):
        return g[None, :, None, None] * (z - m[None, :, None, None]) / \
            jnp.sqrt(v[None, :, None, None] + _EPS) + b[None, :, None, None]

    def conv(z, wgt, b):
        y = jax.lax.conv_general_dilated(
            z, wgt, window_strides=(1, 1), padding=((1, 1), (1, 1)),
            dimension_numbers=("NCHW", "OIHW", "NCHW"),
            precision=jax.lax.Precision.HIGHEST)
        return y + b[None, :, None, None]

    dual = x
    for (w1, b1, g1, be1, m1, v1, w2, b2, g2, be2, m2, v2) in raw_params:
        z = jnp.maximum(bn(conv(dual, w1, b1), g1, be1, m1, v1), 0.0)
        z = bn(conv(z, w2, b2), g2, be2, m2, v2)
        dual = jnp.maximum(dual + z, 0.0)
    return dual


if __name__ == "__main__":
    N, C, H, W, T = 2, 4, 16, 16, 2          # Projnet(channel=4, T=2)

    key = jax.random.PRNGKey(0)
    kx, key = jax.random.split(key)
    x = jax.random.normal(kx, (N, C, H, W), jnp.float32)

    raw_params = []
    for i in range(T):
        ks = jax.random.split(jax.random.fold_in(key, i), 12)
        w1 = 0.2 * jax.random.normal(ks[0], (C, C, 3, 3), jnp.float32)
        b1 = 0.1 * jax.random.normal(ks[1], (C,), jnp.float32)
        g1 = 1.0 + 0.1 * jax.random.normal(ks[2], (C,), jnp.float32)
        be1 = 0.1 * jax.random.normal(ks[3], (C,), jnp.float32)
        m1 = 0.1 * jax.random.normal(ks[4], (C,), jnp.float32)
        v1 = jax.random.uniform(ks[5], (C,), jnp.float32, 0.5, 1.5)
        w2 = 0.2 * jax.random.normal(ks[6], (C, C, 3, 3), jnp.float32)
        b2 = 0.1 * jax.random.normal(ks[7], (C,), jnp.float32)
        g2 = 1.0 + 0.1 * jax.random.normal(ks[8], (C,), jnp.float32)
        be2 = 0.1 * jax.random.normal(ks[9], (C,), jnp.float32)
        m2 = 0.1 * jax.random.normal(ks[10], (C,), jnp.float32)
        v2 = jax.random.uniform(ks[11], (C,), jnp.float32, 0.5, 1.5)
        raw_params.append((w1, b1, g1, be1, m1, v1, w2, b2, g2, be2, m2, v2))

    out = jax.block_until_ready(projnet_forward(x, raw_params))
    ref = jax.block_until_ready(_reference_forward(x, raw_params))

    # DEFAULT MXU precision (single bf16 pass) vs f32 reference, compounded over
    # T residual blocks -> loosened tolerance; structural bugs would be O(1).
    max_err = float(jnp.max(jnp.abs(out - ref)))
    if not jnp.allclose(out, ref, atol=5e-2, rtol=5e-2):
        raise SystemExit(f"Pallas kernel mismatch vs reference, max |err| = {max_err:e}")
    print("KERNEL_OK")
</pallas_src>

<mosaic_0001>
module attributes {stable_mosaic.version = 11 : i64} {
  func.func @_projnet_kernel(%arg0: memref<4x512xf32, #tpu.memory_space<vmem>>, %arg1: memref<9x512xf32, #tpu.memory_space<vmem>>, %arg2: memref<2x4x37xf32, #tpu.memory_space<vmem>>, %arg3: memref<2x4x37xf32, #tpu.memory_space<vmem>>, %arg4: memref<4x512xf32, #tpu.memory_space<vmem>>) attributes {dimension_semantics = [], scalar_prefetch = 0 : i64, scratch_operands = 0 : i64, tpu.core_type = #tpu.core_type<tc>} {
    %c0 = arith.constant 0 : index
    %c0_0 = arith.constant 0 : index
    %0 = vector.load %arg1[%c0, %c0_0] : memref<9x512xf32, #tpu.memory_space<vmem>>, vector<9x512xf32>
    %cst = arith.constant 1.000000e+00 : f32
    %1 = vector.broadcast %cst : f32 to vector<1x512xf32>
    %c0_1 = arith.constant 0 : index
    %c0_2 = arith.constant 0 : index
    %2 = vector.load %arg0[%c0_1, %c0_2] : memref<4x512xf32, #tpu.memory_space<vmem>>, vector<4x512xf32>
    %c0_i32 = arith.constant 0 : i32
    %3 = arith.index_cast %c0_i32 : i32 to index
    %c0_3 = arith.constant 0 : index
    %c0_4 = arith.constant 0 : index
    %4 = vector.load %arg2[%3, %c0_3, %c0_4] : memref<2x4x37xf32, #tpu.memory_space<vmem>>, vector<1x4x37xf32>
    %5 = vector.shape_cast %4 : vector<1x4x37xf32> to vector<4x37xf32>
    %6 = arith.index_cast %c0_i32 : i32 to index
    %c0_5 = arith.constant 0 : index
    %c0_6 = arith.constant 0 : index
    %7 = vector.load %arg3[%6, %c0_5, %c0_6] : memref<2x4x37xf32, #tpu.memory_space<vmem>>, vector<1x4x37xf32>
    %8 = vector.shape_cast %7 : vector<1x4x37xf32> to vector<4x37xf32>
    %c17_i32 = arith.constant 17 : i32
    %9 = tpu.dynamic_rotate %2 by %c17_i32 dim 1 : vector<4x512xf32>, i32 -> vector<4x512xf32>
    %10 = vector.extract_strided_slice %0 {offsets = [0, 0], sizes = [1, 512], strides = [1, 1]} : vector<9x512xf32> to vector<1x512xf32>
    %11 = vector.broadcast %10 : vector<1x512xf32> to vector<4x512xf32>
    %12 = arith.mulf %9, %11 : vector<4x512xf32>
    %c16_i32 = arith.constant 16 : i32
    %13 = tpu.dynamic_rotate %2 by %c16_i32 dim 1 : vector<4x512xf32>, i32 -> vector<4x512xf32>
    %14 = vector.extract_strided_slice %0 {offsets = [1, 0], sizes = [1, 512], strides = [1, 1]} : vector<9x512xf32> to vector<1x512xf32>
    %15 = vector.broadcast %14 : vector<1x512xf32> to vector<4x512xf32>
    %16 = arith.mulf %13, %15 : vector<4x512xf32>
    %c15_i32 = arith.constant 15 : i32
    %17 = tpu.dynamic_rotate %2 by %c15_i32 dim 1 : vector<4x512xf32>, i32 -> vector<4x512xf32>
    %18 = vector.extract_strided_slice %0 {offsets = [2, 0], sizes = [1, 512], strides = [1, 1]} : vector<9x512xf32> to vector<1x512xf32>
    %19 = vector.broadcast %18 : vector<1x512xf32> to vector<4x512xf32>
    %20 = arith.mulf %17, %19 : vector<4x512xf32>
    %c1_i32 = arith.constant 1 : i32
    %21 = tpu.dynamic_rotate %2 by %c1_i32 dim 1 : vector<4x512xf32>, i32 -> vector<4x512xf32>
    %22 = vector.extract_strided_slice %0 {offsets = [3, 0], sizes = [1, 512], strides = [1, 1]} : vector<9x512xf32> to vector<1x512xf32>
    %23 = vector.broadcast %22 : vector<1x512xf32> to vector<4x512xf32>
    %24 = arith.mulf %21, %23 : vector<4x512xf32>
    %c511_i32 = arith.constant 511 : i32
    %25 = tpu.dynamic_rotate %2 by %c511_i32 dim 1 : vector<4x512xf32>, i32 -> vector<4x512xf32>
    %26 = vector.extract_strided_slice %0 {offsets = [5, 0], sizes = [1, 512], strides = [1, 1]} : vector<9x512xf32> to vector<1x512xf32>
    %27 = vector.broadcast %26 : vector<1x512xf32> to vector<4x512xf32>
    %28 = arith.mulf %25, %27 : vector<4x512xf32>
    %c497_i32 = arith.constant 497 : i32
    %29 = tpu.dynamic_rotate %2 by %c497_i32 dim 1 : vector<4x512xf32>, i32 -> vector<4x512xf32>
    %30 = vector.extract_strided_slice %0 {offsets = [6, 0], sizes = [1, 512], strides = [1, 1]} : vector<9x512xf32> to vector<1x512xf32>
    %31 = vector.broadcast %30 : vector<1x512xf32> to vector<4x512xf32>
    %32 = arith.mulf %29, %31 : vector<4x512xf32>
    %c496_i32 = arith.constant 496 : i32
    %33 = tpu.dynamic_rotate %2 by %c496_i32 dim 1 : vector<4x512xf32>, i32 -> vector<4x512xf32>
    %34 = vector.extract_strided_slice %0 {offsets = [7, 0], sizes = [1, 512], strides = [1, 1]} : vector<9x512xf32> to vector<1x512xf32>
    %35 = vector.broadcast %34 : vector<1x512xf32> to vector<4x512xf32>
    %36 = arith.mulf %33, %35 : vector<4x512xf32>
    %c495_i32 = arith.constant 495 : i32
    %37 = tpu.dynamic_rotate %2 by %c495_i32 dim 1 : vector<4x512xf32>, i32 -> vector<4x512xf32>
    %38 = vector.extract_strided_slice %0 {offsets = [8, 0], sizes = [1, 512], strides = [1, 1]} : vector<9x512xf32> to vector<1x512xf32>
    %39 = vector.broadcast %38 : vector<1x512xf32> to vector<4x512xf32>
    %40 = arith.mulf %37, %39 : vector<4x512xf32>
    %41 = tpu.concatenate %12, %16, %20, %24, %2, %28, %32, %36, %40, %1 in 0 : vector<4x512xf32>, vector<4x512xf32>, vector<4x512xf32>, vector<4x512xf32>, vector<4x512xf32>, vector<4x512xf32>, vector<4x512xf32>, vector<4x512xf32>, vector<4x512xf32>, vector<1x512xf32> -> vector<37x512xf32>
    %cst_7 = arith.constant dense<0.000000e+00> : vector<4x512xf32>
    %42 = tpu.matmul %5, %41, %cst_7 {dimension_numbers = #tpu.dot_dimension_numbers<[1], [0], [0], [1], [0, 0, 1, 1], [], []>} : vector<4x37xf32>, vector<37x512xf32>, vector<4x512xf32> -> vector<4x512xf32>
    %cst_8 = arith.constant 0.000000e+00 : f32
    %43 = vector.broadcast %cst_8 : f32 to vector<4x512xf32>
    %44 = arith.maximumf %42, %43 : vector<4x512xf32>
    %c17_i32_9 = arith.constant 17 : i32
    %45 = tpu.dynamic_rotate %44 by %c17_i32_9 dim 1 : vector<4x512xf32>, i32 -> vector<4x512xf32>
    %46 = vector.extract_strided_slice %0 {offsets = [0, 0], sizes = [1, 512], strides = [1, 1]} : vector<9x512xf32> to vector<1x512xf32>
    %47 = vector.broadcast %46 : vector<1x512xf32> to vector<4x512xf32>
    %48 = arith.mulf %45, %47 : vector<4x512xf32>
    %c16_i32_10 = arith.constant 16 : i32
    %49 = tpu.dynamic_rotate %44 by %c16_i32_10 dim 1 : vector<4x512xf32>, i32 -> vector<4x512xf32>
    %50 = vector.extract_strided_slice %0 {offsets = [1, 0], sizes = [1, 512], strides = [1, 1]} : vector<9x512xf32> to vector<1x512xf32>
    %51 = vector.broadcast %50 : vector<1x512xf32> to vector<4x512xf32>
    %52 = arith.mulf %49, %51 : vector<4x512xf32>
    %c15_i32_11 = arith.constant 15 : i32
    %53 = tpu.dynamic_rotate %44 by %c15_i32_11 dim 1 : vector<4x512xf32>, i32 -> vector<4x512xf32>
    %54 = vector.extract_strided_slice %0 {offsets = [2, 0], sizes = [1, 512], strides = [1, 1]} : vector<9x512xf32> to vector<1x512xf32>
    %55 = vector.broadcast %54 : vector<1x512xf32> to vector<4x512xf32>
    %56 = arith.mulf %53, %55 : vector<4x512xf32>
    %c1_i32_12 = arith.constant 1 : i32
    %57 = tpu.dynamic_rotate %44 by %c1_i32_12 dim 1 : vector<4x512xf32>, i32 -> vector<4x512xf32>
    %58 = vector.extract_strided_slice %0 {offsets = [3, 0], sizes = [1, 512], strides = [1, 1]} : vector<9x512xf32> to vector<1x512xf32>
    %59 = vector.broadcast %58 : vector<1x512xf32> to vector<4x512xf32>
    %60 = arith.mulf %57, %59 : vector<4x512xf32>
    %c511_i32_13 = arith.constant 511 : i32
    %61 = tpu.dynamic_rotate %44 by %c511_i32_13 dim 1 : vector<4x512xf32>, i32 -> vector<4x512xf32>
    %62 = vector.extract_strided_slice %0 {offsets = [5, 0], sizes = [1, 512], strides = [1, 1]} : vector<9x512xf32> to vector<1x512xf32>
    %63 = vector.broadcast %62 : vector<1x512xf32> to vector<4x512xf32>
    %64 = arith.mulf %61, %63 : vector<4x512xf32>
    %c497_i32_14 = arith.constant 497 : i32
    %65 = tpu.dynamic_rotate %44 by %c497_i32_14 dim 1 : vector<4x512xf32>, i32 -> vector<4x512xf32>
    %66 = vector.extract_strided_slice %0 {offsets = [6, 0], sizes = [1, 512], strides = [1, 1]} : vector<9x512xf32> to vector<1x512xf32>
    %67 = vector.broadcast %66 : vector<1x512xf32> to vector<4x512xf32>
    %68 = arith.mulf %65, %67 : vector<4x512xf32>
    %c496_i32_15 = arith.constant 496 : i32
    %69 = tpu.dynamic_rotate %44 by %c496_i32_15 dim 1 : vector<4x512xf32>, i32 -> vector<4x512xf32>
    %70 = vector.extract_strided_slice %0 {offsets = [7, 0], sizes = [1, 512], strides = [1, 1]} : vector<9x512xf32> to vector<1x512xf32>
    %71 = vector.broadcast %70 : vector<1x512xf32> to vector<4x512xf32>
    %72 = arith.mulf %69, %71 : vector<4x512xf32>
    %c495_i32_16 = arith.constant 495 : i32
    %73 = tpu.dynamic_rotate %44 by %c495_i32_16 dim 1 : vector<4x512xf32>, i32 -> vector<4x512xf32>
    %74 = vector.extract_strided_slice %0 {offsets = [8, 0], sizes = [1, 512], strides = [1, 1]} : vector<9x512xf32> to vector<1x512xf32>
    %75 = vector.broadcast %74 : vector<1x512xf32> to vector<4x512xf32>
    %76 = arith.mulf %73, %75 : vector<4x512xf32>
    %77 = tpu.concatenate %48, %52, %56, %60, %44, %64, %68, %72, %76, %1 in 0 : vector<4x512xf32>, vector<4x512xf32>, vector<4x512xf32>, vector<4x512xf32>, vector<4x512xf32>, vector<4x512xf32>, vector<4x512xf32>, vector<4x512xf32>, vector<4x512xf32>, vector<1x512xf32> -> vector<37x512xf32>
    %cst_17 = arith.constant dense<0.000000e+00> : vector<4x512xf32>
    %78 = tpu.matmul %8, %77, %cst_17 {dimension_numbers = #tpu.dot_dimension_numbers<[1], [0], [0], [1], [0, 0, 1, 1], [], []>} : vector<4x37xf32>, vector<37x512xf32>, vector<4x512xf32> -> vector<4x512xf32>
    %79 = arith.addf %2, %78 : vector<4x512xf32>
    %cst_18 = arith.constant 0.000000e+00 : f32
    %80 = vector.broadcast %cst_18 : f32 to vector<4x512xf32>
    %81 = arith.maximumf %79, %80 : vector<4x512xf32>
    %c1_i32_19 = arith.constant 1 : i32
    %82 = arith.index_cast %c1_i32_19 : i32 to index
    %c0_20 = arith.constant 0 : index
    %c0_21 = arith.constant 0 : index
    %83 = vector.load %arg2[%82, %c0_20, %c0_21] : memref<2x4x37xf32, #tpu.memory_space<vmem>>, vector<1x4x37xf32>
    %84 = vector.shape_cast %83 : vector<1x4x37xf32> to vector<4x37xf32>
    %85 = arith.index_cast %c1_i32_19 : i32 to index
    %c0_22 = arith.constant 0 : index
    %c0_23 = arith.constant 0 : index
    %86 = vector.load %arg3[%85, %c0_22, %c0_23] : memref<2x4x37xf32, #tpu.memory_space<vmem>>, vector<1x4x37xf32>
    %87 = vector.shape_cast %86 : vector<1x4x37xf32> to vector<4x37xf32>
    %c17_i32_24 = arith.constant 17 : i32
    %88 = tpu.dynamic_rotate %81 by %c17_i32_24 dim 1 : vector<4x512xf32>, i32 -> vector<4x512xf32>
    %89 = vector.extract_strided_slice %0 {offsets = [0, 0], sizes = [1, 512], strides = [1, 1]} : vector<9x512xf32> to vector<1x512xf32>
    %90 = vector.broadcast %89 : vector<1x512xf32> to vector<4x512xf32>
    %91 = arith.mulf %88, %90 : vector<4x512xf32>
    %c16_i32_25 = arith.constant 16 : i32
    %92 = tpu.dynamic_rotate %81 by %c16_i32_25 dim 1 : vector<4x512xf32>, i32 -> vector<4x512xf32>
    %93 = vector.extract_strided_slice %0 {offsets = [1, 0], sizes = [1, 512], strides = [1, 1]} : vector<9x512xf32> to vector<1x512xf32>
    %94 = vector.broadcast %93 : vector<1x512xf32> to vector<4x512xf32>
    %95 = arith.mulf %92, %94 : vector<4x512xf32>
    %c15_i32_26 = arith.constant 15 : i32
    %96 = tpu.dynamic_rotate %81 by %c15_i32_26 dim 1 : vector<4x512xf32>, i32 -> vector<4x512xf32>
    %97 = vector.extract_strided_slice %0 {offsets = [2, 0], sizes = [1, 512], strides = [1, 1]} : vector<9x512xf32> to vector<1x512xf32>
    %98 = vector.broadcast %97 : vector<1x512xf32> to vector<4x512xf32>
    %99 = arith.mulf %96, %98 : vector<4x512xf32>
    %c1_i32_27 = arith.constant 1 : i32
    %100 = tpu.dynamic_rotate %81 by %c1_i32_27 dim 1 : vector<4x512xf32>, i32 -> vector<4x512xf32>
    %101 = vector.extract_strided_slice %0 {offsets = [3, 0], sizes = [1, 512], strides = [1, 1]} : vector<9x512xf32> to vector<1x512xf32>
    %102 = vector.broadcast %101 : vector<1x512xf32> to vector<4x512xf32>
    %103 = arith.mulf %100, %102 : vector<4x512xf32>
    %c511_i32_28 = arith.constant 511 : i32
    %104 = tpu.dynamic_rotate %81 by %c511_i32_28 dim 1 : vector<4x512xf32>, i32 -> vector<4x512xf32>
    %105 = vector.extract_strided_slice %0 {offsets = [5, 0], sizes = [1, 512], strides = [1, 1]} : vector<9x512xf32> to vector<1x512xf32>
    %106 = vector.broadcast %105 : vector<1x512xf32> to vector<4x512xf32>
    %107 = arith.mulf %104, %106 : vector<4x512xf32>
    %c497_i32_29 = arith.constant 497 : i32
    %108 = tpu.dynamic_rotate %81 by %c497_i32_29 dim 1 : vector<4x512xf32>, i32 -> vector<4x512xf32>
    %109 = vector.extract_strided_slice %0 {offsets = [6, 0], sizes = [1, 512], strides = [1, 1]} : vector<9x512xf32> to vector<1x512xf32>
    %110 = vector.broadcast %109 : vector<1x512xf32> to vector<4x512xf32>
    %111 = arith.mulf %108, %110 : vector<4x512xf32>
    %c496_i32_30 = arith.constant 496 : i32
    %112 = tpu.dynamic_rotate %81 by %c496_i32_30 dim 1 : vector<4x512xf32>, i32 -> vector<4x512xf32>
    %113 = vector.extract_strided_slice %0 {offsets = [7, 0], sizes = [1, 512], strides = [1, 1]} : vector<9x512xf32> to vector<1x512xf32>
    %114 = vector.broadcast %113 : vector<1x512xf32> to vector<4x512xf32>
    %115 = arith.mulf %112, %114 : vector<4x512xf32>
    %c495_i32_31 = arith.constant 495 : i32
    %116 = tpu.dynamic_rotate %81 by %c495_i32_31 dim 1 : vector<4x512xf32>, i32 -> vector<4x512xf32>
    %117 = vector.extract_strided_slice %0 {offsets = [8, 0], sizes = [1, 512], strides = [1, 1]} : vector<9x512xf32> to vector<1x512xf32>
    %118 = vector.broadcast %117 : vector<1x512xf32> to vector<4x512xf32>
    %119 = arith.mulf %116, %118 : vector<4x512xf32>
    %120 = tpu.concatenate %91, %95, %99, %103, %81, %107, %111, %115, %119, %1 in 0 : vector<4x512xf32>, vector<4x512xf32>, vector<4x512xf32>, vector<4x512xf32>, vector<4x512xf32>, vector<4x512xf32>, vector<4x512xf32>, vector<4x512xf32>, vector<4x512xf32>, vector<1x512xf32> -> vector<37x512xf32>
    %cst_32 = arith.constant dense<0.000000e+00> : vector<4x512xf32>
    %121 = tpu.matmul %84, %120, %cst_32 {dimension_numbers = #tpu.dot_dimension_numbers<[1], [0], [0], [1], [0, 0, 1, 1], [], []>} : vector<4x37xf32>, vector<37x512xf32>, vector<4x512xf32> -> vector<4x512xf32>
    %cst_33 = arith.constant 0.000000e+00 : f32
    %122 = vector.broadcast %cst_33 : f32 to vector<4x512xf32>
    %123 = arith.maximumf %121, %122 : vector<4x512xf32>
    %c17_i32_34 = arith.constant 17 : i32
    %124 = tpu.dynamic_rotate %123 by %c17_i32_34 dim 1 : vector<4x512xf32>, i32 -> vector<4x512xf32>
    %125 = vector.extract_strided_slice %0 {offsets = [0, 0], sizes = [1, 512], strides = [1, 1]} : vector<9x512xf32> to vector<1x512xf32>
    %126 = vector.broadcast %125 : vector<1x512xf32> to vector<4x512xf32>
    %127 = arith.mulf %124, %126 : vector<4x512xf32>
    %c16_i32_35 = arith.constant 16 : i32
    %128 = tpu.dynamic_rotate %123 by %c16_i32_35 dim 1 : vector<4x512xf32>, i32 -> vector<4x512xf32>
    %129 = vector.extract_strided_slice %0 {offsets = [1, 0], sizes = [1, 512], strides = [1, 1]} : vector<9x512xf32> to vector<1x512xf32>
    %130 = vector.broadcast %129 : vector<1x512xf32> to vector<4x512xf32>
    %131 = arith.mulf %128, %130 : vector<4x512xf32>
    %c15_i32_36 = arith.constant 15 : i32
    %132 = tpu.dynamic_rotate %123 by %c15_i32_36 dim 1 : vector<4x512xf32>, i32 -> vector<4x512xf32>
    %133 = vector.extract_strided_slice %0 {offsets = [2, 0], sizes = [1, 512], strides = [1, 1]} : vector<9x512xf32> to vector<1x512xf32>
    %134 = vector.broadcast %133 : vector<1x512xf32> to vector<4x512xf32>
    %135 = arith.mulf %132, %134 : vector<4x512xf32>
    %c1_i32_37 = arith.constant 1 : i32
    %136 = tpu.dynamic_rotate %123 by %c1_i32_37 dim 1 : vector<4x512xf32>, i32 -> vector<4x512xf32>
    %137 = vector.extract_strided_slice %0 {offsets = [3, 0], sizes = [1, 512], strides = [1, 1]} : vector<9x512xf32> to vector<1x512xf32>
    %138 = vector.broadcast %137 : vector<1x512xf32> to vector<4x512xf32>
    %139 = arith.mulf %136, %138 : vector<4x512xf32>
    %c511_i32_38 = arith.constant 511 : i32
    %140 = tpu.dynamic_rotate %123 by %c511_i32_38 dim 1 : vector<4x512xf32>, i32 -> vector<4x512xf32>
    %141 = vector.extract_strided_slice %0 {offsets = [5, 0], sizes = [1, 512], strides = [1, 1]} : vector<9x512xf32> to vector<1x512xf32>
    %142 = vector.broadcast %141 : vector<1x512xf32> to vector<4x512xf32>
    %143 = arith.mulf %140, %142 : vector<4x512xf32>
    %c497_i32_39 = arith.constant 497 : i32
    %144 = tpu.dynamic_rotate %123 by %c497_i32_39 dim 1 : vector<4x512xf32>, i32 -> vector<4x512xf32>
    %145 = vector.extract_strided_slice %0 {offsets = [6, 0], sizes = [1, 512], strides = [1, 1]} : vector<9x512xf32> to vector<1x512xf32>
    %146 = vector.broadcast %145 : vector<1x512xf32> to vector<4x512xf32>
    %147 = arith.mulf %144, %146 : vector<4x512xf32>
    %c496_i32_40 = arith.constant 496 : i32
    %148 = tpu.dynamic_rotate %123 by %c496_i32_40 dim 1 : vector<4x512xf32>, i32 -> vector<4x512xf32>
    %149 = vector.extract_strided_slice %0 {offsets = [7, 0], sizes = [1, 512], strides = [1, 1]} : vector<9x512xf32> to vector<1x512xf32>
    %150 = vector.broadcast %149 : vector<1x512xf32> to vector<4x512xf32>
    %151 = arith.mulf %148, %150 : vector<4x512xf32>
    %c495_i32_41 = arith.constant 495 : i32
    %152 = tpu.dynamic_rotate %123 by %c495_i32_41 dim 1 : vector<4x512xf32>, i32 -> vector<4x512xf32>
    %153 = vector.extract_strided_slice %0 {offsets = [8, 0], sizes = [1, 512], strides = [1, 1]} : vector<9x512xf32> to vector<1x512xf32>
    %154 = vector.broadcast %153 : vector<1x512xf32> to vector<4x512xf32>
    %155 = arith.mulf %152, %154 : vector<4x512xf32>
    %156 = tpu.concatenate %127, %131, %135, %139, %123, %143, %147, %151, %155, %1 in 0 : vector<4x512xf32>, vector<4x512xf32>, vector<4x512xf32>, vector<4x512xf32>, vector<4x512xf32>, vector<4x512xf32>, vector<4x512xf32>, vector<4x512xf32>, vector<4x512xf32>, vector<1x512xf32> -> vector<37x512xf32>
    %cst_42 = arith.constant dense<0.000000e+00> : vector<4x512xf32>
    %157 = tpu.matmul %87, %156, %cst_42 {dimension_numbers = #tpu.dot_dimension_numbers<[1], [0], [0], [1], [0, 0, 1, 1], [], []>} : vector<4x37xf32>, vector<37x512xf32>, vector<4x512xf32> -> vector<4x512xf32>
    %158 = arith.addf %81, %157 : vector<4x512xf32>
    %cst_43 = arith.constant 0.000000e+00 : f32
    %159 = vector.broadcast %cst_43 : f32 to vector<4x512xf32>
    %160 = arith.maximumf %158, %159 : vector<4x512xf32>
    %c2_i32 = arith.constant 2 : i32
    %c0_44 = arith.constant 0 : index
    %c0_45 = arith.constant 0 : index
    %161 = vector.load %arg4[%c0_44, %c0_45] : memref<4x512xf32, #tpu.memory_space<vmem>>, vector<4x512xf32>
    tpu.vector_store %arg4[%c0_44, %c0_45], %160 {strides = array<i32>} : memref<4x512xf32, #tpu.memory_space<vmem>>, vector<4x512xf32>,
    return
  }
}

</mosaic_0001>

<llo_original>
// kernel: projnet_forward.1
$region0: #{projnet_forward.1}
  #allocation0 [shape = 'u32[]', space=smem, size = 0x4, offset = 0x4, fixed_abs, tag = 'smem constant byte address 0x4 - core index']
  #allocation1 [shape = 'u32[144,128]{1,0:T(1,128)}', space=vmem, size = 0x12000, scoped, tag = 'internal scratch']
  %s0 = inlined_call_operand.vmem [shape: f32[4,512], index: 0, kind: input, shape index: {}]
  %s1 = inlined_call_operand.vmem [shape: f32[9,512], index: 1, kind: input, shape index: {}]
  %s2 = inlined_call_operand.vmem [shape: f32[2,4,37], index: 2, kind: input, shape index: {}]
  %s3 = inlined_call_operand.vmem [shape: f32[2,4,37], index: 3, kind: input, shape index: {}]
  %s4 = inlined_call_operand.vmem [shape: f32[4,512], index: 4, kind: output, shape index: {}]
  %s5 = sld [smem:[#allocation0]]
  $region26: #{projnet_forward.1} parent=0
    _
  %s7 = ssub.s32 1, %s5
  %s8 = scalar_select 0, %s7, %s5
  // Predicated region
  $region2: #{projnet_forward.1} parent=0 // pred_check
    _
  $region3: #{projnet_forward.1} parent=0 // pred_check_branch
    %10 = sbr.rel (0) target = $region5
  $region4: #{projnet_forward.1} parent=0 // pred_region
    _
  $region5: #{projnet_forward.1} parent=0 // pred_fallthru
    _
  // Predicated region
  $region6: #{projnet_forward.1} parent=0 // pred_check
    _
  $region7: #{projnet_forward.1} parent=0 // pred_check_branch
    %12 = sbr.rel (0) target = $region9
  $region8: #{projnet_forward.1} parent=0 // pred_region
    _
  $region9: #{projnet_forward.1} parent=0 // pred_fallthru
    _
  // Predicated region
  $region10: #{projnet_forward.1} parent=0 // pred_check
    _
  $region11: #{projnet_forward.1} parent=0 // pred_check_branch
    %14 = sbr.rel (0) target = $region13
  $region12: #{projnet_forward.1} parent=0 // pred_region
    _
  $region13: #{projnet_forward.1} parent=0 // pred_fallthru
    _
  // Predicated region
  $region14: #{projnet_forward.1} parent=0 // pred_check
    _
  $region15: #{projnet_forward.1} parent=0 // pred_check_branch
    %16 = sbr.rel (0) target = $region17
  $region16: #{projnet_forward.1} parent=0 // pred_region
    _
  $region17: #{projnet_forward.1} parent=0 // pred_fallthru
    _
  %v17 = vld [vmem:[%s1] sm:$0xff]
  %v18 = vld [vmem:[%s1 + $0x8] sm:$0xff]
  %v19 = vld [vmem:[%s1 + $0x10] sm:$0xff]
  %v20 = vld [vmem:[%s1 + $0x18] sm:$0xff]
  %v21 = vld [vmem:[%s1 + $0x20] sm:$0x1]
  %v22 = vld [vmem:[%s1 + $0x28] sm:$0x1]
  %v23 = vld [vmem:[%s1 + $0x30] sm:$0x1]
  %v24 = vld [vmem:[%s1 + $0x38] sm:$0x1]
  %v25 = vld [vmem:[%s0] sm:$0xff]
  %v26 = vld [vmem:[%s0 + $0x8] sm:$0xff]
  %v27 = vld [vmem:[%s2] sm:$0xf]
  %v28 = vld [vmem:[%s3] sm:$0xf]
  %v31 = vcombine.high %v25, %v25
  %v32 = vcombine.high %v26, %v26
  %35 = vrot.lane.b32.xlu0 %v25, 17
  %v36 = vpop.permute.xlu0 %35
  %37 = vrot.lane.b32.xlu0 %v31, 17
  %v38 = vpop.permute.xlu0 %37
  %39 = vrot.lane.b32.xlu0 %v26, 17
  %v40 = vpop.permute.xlu0 %39
  %41 = vrot.lane.b32.xlu0 %v32, 17
  %v42 = vpop.permute.xlu0 %41
  %v43 = vlaneseq
  %v44 = vand.u32 %v43, 127
  %vm45 = vcmp.lt.s32.totalorder %v44, 17
  %v46 = vsel %vm45, %v40, %v42
  %v47 = vsel %vm45, %v38, %v40
  %v48 = vsel %vm45, %v36, %v38
  %v49 = vsel %vm45, %v42, %v36
  %v50 = vlaneseq
  %v51 = vshrl.u32 %v50, 7
  %v52 = vsub.s32 0, %v51
  %v53 = vrot.slane %v17, %v52
  %v54 = vlaneseq
  %v55 = vshrl.u32 %v54, 7
  %v56 = vsub.s32 0, %v55
  %v57 = vrot.slane %v18, %v56
  %v58 = vlaneseq
  %v59 = vshrl.u32 %v58, 7
  %v60 = vsub.s32 0, %v59
  %v61 = vrot.slane %v19, %v60
  %v62 = vlaneseq
  %v63 = vshrl.u32 %v62, 7
  %v64 = vsub.s32 0, %v63
  %v65 = vrot.slane %v20, %v64
  %v66 = vmul.f32 %v49, %v53
  %v67 = vmul.f32 %v48, %v57
  %v68 = vmul.f32 %v47, %v61
  %v69 = vmul.f32 %v46, %v65
  %70 = vrot.lane.b32.xlu0 %v25, 16
  %v71 = vpop.permute.xlu0 %70
  %72 = vrot.lane.b32.xlu0 %v31, 16
  %v73 = vpop.permute.xlu0 %72
  %74 = vrot.lane.b32.xlu0 %v26, 16
  %v75 = vpop.permute.xlu0 %74
  %76 = vrot.lane.b32.xlu0 %v32, 16
  %v77 = vpop.permute.xlu0 %76
  %vm78 = vcmp.lt.s32.totalorder %v44, 16
  %v79 = vsel %vm78, %v75, %v77
  %v80 = vsel %vm78, %v73, %v75
  %v81 = vsel %vm78, %v71, %v73
  %v82 = vsel %vm78, %v77, %v71
  %v83 = vlaneseq
  %v84 = vshrl.u32 %v83, 7
  %v85 = vsub.s32 1, %v84
  %v86 = vrot.slane %v17, %v85
  %v87 = vlaneseq
  %v88 = vshrl.u32 %v87, 7
  %v89 = vsub.s32 1, %v88
  %v90 = vrot.slane %v18, %v89
  %v91 = vlaneseq
  %v92 = vshrl.u32 %v91, 7
  %v93 = vsub.s32 1, %v92
  %v94 = vrot.slane %v19, %v93
  %v95 = vlaneseq
  %v96 = vshrl.u32 %v95, 7
  %v97 = vsub.s32 1, %v96
  %v98 = vrot.slane %v20, %v97
  %v99 = vmul.f32 %v82, %v86
  %v100 = vmul.f32 %v81, %v90
  %v101 = vmul.f32 %v80, %v94
  %v102 = vmul.f32 %v79, %v98
  %103 = vrot.lane.b32.xlu0 %v25, 15
  %v104 = vpop.permute.xlu0 %103
  %105 = vrot.lane.b32.xlu0 %v31, 15
  %v106 = vpop.permute.xlu0 %105
  %107 = vrot.lane.b32.xlu0 %v26, 15
  %v108 = vpop.permute.xlu0 %107
  %109 = vrot.lane.b32.xlu0 %v32, 15
  %v110 = vpop.permute.xlu0 %109
  %vm111 = vcmp.lt.s32.totalorder %v44, 15
  %v112 = vsel %vm111, %v108, %v110
  %v113 = vsel %vm111, %v106, %v108
  %v114 = vsel %vm111, %v104, %v106
  %v115 = vsel %vm111, %v110, %v104
  %v116 = vlaneseq
  %v117 = vshrl.u32 %v116, 7
  %v118 = vsub.s32 2, %v117
  %v119 = vrot.slane %v17, %v118
  %v120 = vlaneseq
  %v121 = vshrl.u32 %v120, 7
  %v122 = vsub.s32 2, %v121
  %v123 = vrot.slane %v18, %v122
  %v124 = vlaneseq
  %v125 = vshrl.u32 %v124, 7
  %v126 = vsub.s32 2, %v125
  %v127 = vrot.slane %v19, %v126
  %v128 = vlaneseq
  %v129 = vshrl.u32 %v128, 7
  %v130 = vsub.s32 2, %v129
  %v131 = vrot.slane %v20, %v130
  %v132 = vmul.f32 %v115, %v119
  %v133 = vmul.f32 %v114, %v123
  %v134 = vmul.f32 %v113, %v127
  %v135 = vmul.f32 %v112, %v131
  %136 = vrot.lane.b32.xlu0 %v25, 1
  %v137 = vpop.permute.xlu0 %136
  %138 = vrot.lane.b32.xlu0 %v31, 1
  %v139 = vpop.permute.xlu0 %138
  %140 = vrot.lane.b32.xlu0 %v26, 1
  %v141 = vpop.permute.xlu0 %140
  %142 = vrot.lane.b32.xlu0 %v32, 1
  %v143 = vpop.permute.xlu0 %142
  %vm144 = vcmp.lt.s32.totalorder %v44, 1
  %v145 = vsel %vm144, %v141, %v143
  %v146 = vsel %vm144, %v139, %v141
  %v147 = vsel %vm144, %v137, %v139
  %v148 = vsel %vm144, %v143, %v137
  %v149 = vlaneseq
  %v150 = vshrl.u32 %v149, 7
  %v151 = vsub.s32 3, %v150
  %v152 = vrot.slane %v17, %v151
  %v153 = vlaneseq
  %v154 = vshrl.u32 %v153, 7
  %v155 = vsub.s32 3, %v154
  %v156 = vrot.slane %v18, %v155
  %v157 = vlaneseq
  %v158 = vshrl.u32 %v157, 7
  %v159 = vsub.s32 3, %v158
  %v160 = vrot.slane %v19, %v159
  %v161 = vlaneseq
  %v162 = vshrl.u32 %v161, 7
  %v163 = vsub.s32 3, %v162
  %v164 = vrot.slane %v20, %v163
  %v165 = vmul.f32 %v148, %v152
  %v166 = vmul.f32 %v147, %v156
  %v167 = vmul.f32 %v146, %v160
  %v168 = vmul.f32 %v145, %v164
  %169 = vrot.lane.b32.xlu0 %v25, 127
  %v170 = vpop.permute.xlu0 %169
  %171 = vrot.lane.b32.xlu0 %v31, 127
  %v172 = vpop.permute.xlu0 %171
  %173 = vrot.lane.b32.xlu0 %v26, 127
  %v174 = vpop.permute.xlu0 %173
  %175 = vrot.lane.b32.xlu0 %v32, 127
  %v176 = vpop.permute.xlu0 %175
  %vm177 = vcmp.lt.s32.totalorder %v44, 127
  %v178 = vsel %vm177, %v174, %v176
  %v179 = vsel %vm177, %v172, %v174
  %v180 = vsel %vm177, %v170, %v172
  %v181 = vsel %vm177, %v176, %v170
  %v182 = vlaneseq
  %v183 = vshrl.u32 %v182, 7
  %v184 = vsub.s32 5, %v183
  %v185 = vrot.slane %v17, %v184
  %v186 = vlaneseq
  %v187 = vshrl.u32 %v186, 7
  %v188 = vsub.s32 5, %v187
  %v189 = vrot.slane %v18, %v188
  %v190 = vlaneseq
  %v191 = vshrl.u32 %v190, 7
  %v192 = vsub.s32 5, %v191
  %v193 = vrot.slane %v19, %v192
  %v194 = vlaneseq
  %v195 = vshrl.u32 %v194, 7
  %v196 = vsub.s32 5, %v195
  %v197 = vrot.slane %v20, %v196
  %v198 = vmul.f32 %v180, %v185
  %v199 = vmul.f32 %v179, %v189
  %v200 = vmul.f32 %v178, %v193
  %v201 = vmul.f32 %v181, %v197
  %202 = vrot.lane.b32.xlu0 %v25, 113
  %v203 = vpop.permute.xlu0 %202
  %204 = vrot.lane.b32.xlu0 %v31, 113
  %v205 = vpop.permute.xlu0 %204
  %206 = vrot.lane.b32.xlu0 %v26, 113
  %v207 = vpop.permute.xlu0 %206
  %208 = vrot.lane.b32.xlu0 %v32, 113
  %v209 = vpop.permute.xlu0 %208
  %vm210 = vcmp.lt.s32.totalorder %v44, 113
  %v211 = vsel %vm210, %v207, %v209
  %v212 = vsel %vm210, %v205, %v207
  %v213 = vsel %vm210, %v203, %v205
  %v214 = vsel %vm210, %v209, %v203
  %v215 = vlaneseq
  %v216 = vshrl.u32 %v215, 7
  %v217 = vsub.s32 6, %v216
  %v218 = vrot.slane %v17, %v217
  %v219 = vlaneseq
  %v220 = vshrl.u32 %v219, 7
  %v221 = vsub.s32 6, %v220
  %v222 = vrot.slane %v18, %v221
  %v223 = vlaneseq
  %v224 = vshrl.u32 %v223, 7
  %v225 = vsub.s32 6, %v224
  %v226 = vrot.slane %v19, %v225
  %v227 = vlaneseq
  %v228 = vshrl.u32 %v227, 7
  %v229 = vsub.s32 6, %v228
  %v230 = vrot.slane %v20, %v229
  %v231 = vmul.f32 %v213, %v218
  %v232 = vmul.f32 %v212, %v222
  %v233 = vmul.f32 %v211, %v226
  %v234 = vmul.f32 %v214, %v230
  %235 = vrot.lane.b32.xlu0 %v25, 112
  %v236 = vpop.permute.xlu0 %235
  %237 = vrot.lane.b32.xlu0 %v31, 112
  %v238 = vpop.permute.xlu0 %237
  %239 = vrot.lane.b32.xlu0 %v26, 112
  %v240 = vpop.permute.xlu0 %239
  %241 = vrot.lane.b32.xlu0 %v32, 112
  %v242 = vpop.permute.xlu0 %241
  %vm243 = vcmp.lt.s32.totalorder %v44, 112
  %v244 = vsel %vm243, %v240, %v242
  %v245 = vsel %vm243, %v238, %v240
  %v246 = vsel %vm243, %v236, %v238
  %v247 = vsel %vm243, %v242, %v236
  %v248 = vlaneseq
  %v249 = vshrl.u32 %v248, 7
  %v250 = vsub.s32 7, %v249
  %v251 = vrot.slane %v17, %v250
  %v252 = vlaneseq
  %v253 = vshrl.u32 %v252, 7
  %v254 = vsub.s32 7, %v253
  %v255 = vrot.slane %v18, %v254
  %v256 = vlaneseq
  %v257 = vshrl.u32 %v256, 7
  %v258 = vsub.s32 7, %v257
  %v259 = vrot.slane %v19, %v258
  %v260 = vlaneseq
  %v261 = vshrl.u32 %v260, 7
  %v262 = vsub.s32 7, %v261
  %v263 = vrot.slane %v20, %v262
  %v264 = vmul.f32 %v246, %v251
  %v265 = vmul.f32 %v245, %v255
  %v266 = vmul.f32 %v244, %v259
  %v267 = vmul.f32 %v247, %v263
  %268 = vrot.lane.b32.xlu0 %v25, 111
  %v269 = vpop.permute.xlu0 %268
  %270 = vrot.lane.b32.xlu0 %v31, 111
  %v271 = vpop.permute.xlu0 %270
  %272 = vrot.lane.b32.xlu0 %v26, 111
  %v273 = vpop.permute.xlu0 %272
  %274 = vrot.lane.b32.xlu0 %v32, 111
  %v275 = vpop.permute.xlu0 %274
  %vm276 = vcmp.lt.s32.totalorder %v44, 111
  %v277 = vsel %vm276, %v273, %v275
  %v278 = vsel %vm276, %v271, %v273
  %v279 = vsel %vm276, %v269, %v271
  %v280 = vsel %vm276, %v275, %v269
  %v281 = vlaneseq
  %v282 = vshrl.u32 %v281, 7
  %v283 = vsub.s32 0, %v282
  %v284 = vrot.slane %v21, %v283
  %v285 = vlaneseq
  %v286 = vshrl.u32 %v285, 7
  %v287 = vsub.s32 0, %v286
  %v288 = vrot.slane %v22, %v287
  %v289 = vlaneseq
  %v290 = vshrl.u32 %v289, 7
  %v291 = vsub.s32 0, %v290
  %v292 = vrot.slane %v23, %v291
  %v293 = vlaneseq
  %v294 = vshrl.u32 %v293, 7
  %v295 = vsub.s32 0, %v294
  %v296 = vrot.slane %v24, %v295
  %v297 = vmul.f32 %v279, %v284
  %v298 = vmul.f32 %v278, %v288
  %v299 = vmul.f32 %v277, %v292
  %v300 = vmul.f32 %v280, %v296
  %v305 = vrot.slane %v99, 4
  %v306 = vrot.slane %v100, 4
  %v307 = vrot.slane %v101, 4
  %v308 = vrot.slane %v102, 4
  %v317 = vrot.slane %v165, 4
  %v318 = vrot.slane %v166, 4
  %v319 = vrot.slane %v167, 4
  %v320 = vrot.slane %v168, 4
  %v329 = vrot.slane %v198, 4
  %v330 = vrot.slane %v199, 4
  %v331 = vrot.slane %v200, 4
  %v332 = vrot.slane %v201, 4
  %v341 = vrot.slane %v264, 4
  %v342 = vrot.slane %v265, 4
  %v343 = vrot.slane %v266, 4
  %v344 = vrot.slane %v267, 4
  %vm349 = vcmask 1043456
  %v350 = vsel %vm349, %v66, %v305
  %v351 = vsel %vm349, %v67, %v306
  %v352 = vsel %vm349, %v68, %v307
  %v353 = vsel %vm349, %v69, %v308
  %v354 = vsel %vm349, %v132, %v317
  %v355 = vsel %vm349, %v133, %v318
  %v356 = vsel %vm349, %v134, %v319
  %v357 = vsel %vm349, %v135, %v320
  %v358 = vsel %vm349, %v25, %v329
  %v359 = vsel %vm349, %v31, %v330
  %v360 = vsel %vm349, %v26, %v331
  %v361 = vsel %vm349, %v32, %v332
  %v362 = vsel %vm349, %v231, %v341
  %v363 = vsel %vm349, %v232, %v342
  %v364 = vsel %vm349, %v233, %v343
  %v365 = vsel %vm349, %v234, %v344
  %v366 = vsel %vm349, %v297, 1.0
  %v367 = vsel %vm349, %v298, 1.0
  %v368 = vsel %vm349, %v299, 1.0
  %v369 = vsel %vm349, %v300, 1.0
  %vm370 = vcmask 302080
  %v372 = vsel %vm370, %v27, 0
  %vm374 = vcmask 1044480
  %v376 = vsel %vm374, %v366, 0
  %v379 = vsel %vm374, %v367, 0
  %v382 = vsel %vm374, %v368, 0
  %v385 = vsel %vm374, %v369, 0
  %387 = vmatprep.subr.mxu0 %v351
  %388 = vmatpush1.msra.mxu0 %v350
  %389 = vmatprep.subr.mxu0 %v355
  %390 = vmatpush1.msra.mxu0 %v354
  %391 = vmatprep.subr.mxu0 %v359
  %392 = vmatpush1.msra.mxu0 %v358
  %393 = vmatprep.subr.mxu0 %v363
  %394 = vmatpush1.msra.mxu0 %v362
  %395 = vmatprep.subr.mxu0 %v379
  %396 = vmatpush1.msra.mxu0 %v376
  %397 = vmatprep.subr.mxu0 0.0
  %398 = vmatpush1.msra.mxu0 0.0
  %399 = vmatprep.subr.mxu0 0.0
  %400 = vmatpush1.msra.mxu0 0.0
  %401 = vmatprep.subr.mxu0 0.0
  %402 = vmatpush1.msra.mxu0 0.0
  %403 = vmatprep.subr.mxu0 0.0
  %404 = vmatpush1.msra.mxu0 0.0
  %405 = vmatprep.subr.mxu0 0.0
  %406 = vmatpush1.msra.mxu0 0.0
  %407 = vmatprep.subr.mxu0 0.0
  %408 = vmatpush1.msra.mxu0 0.0
  %409 = vmatprep.subr.mxu0 0.0
  %410 = vmatpush1.msra.mxu0 0.0
  %411 = vmatprep.subr.mxu0 0.0
  %412 = vmatpush1.msra.mxu0 0.0
  %413 = vmatprep.subr.mxu0 0.0
  %414 = vmatpush1.msra.mxu0 0.0
  %415 = vmatprep.subr.mxu0 0.0
  %416 = vmatpush1.msra.mxu0 0.0
  %417 = vmatprep.subr.mxu0 0.0
  %418 = vmatpush1.msra.mxu0 0.0
  %419 = vmatprep.subr.mxu0 0.0
  %420 = vmatpush1.msra.mxu0 0.0
  %421 = vmatprep.subr.mxu0 0.0
  %422 = vmatpush1.msra.mxu0 0.0
  %423 = vmatprep.subr.mxu0 0.0
  %424 = vmatpush1.msra.mxu0 0.0
  %425 = vmatprep.subr.mxu0 0.0
  %426 = vmatpush1.msra.mxu0 0.0
  %427 = vmatprep.subr.mxu0 0.0
  %428 = vmatpush1.msra.mxu0 0.0
  %429 = vmatprep.subr.mxu0 0.0
  %430 = vmatpush1.msra.mxu0 0.0
  %431 = vmatprep.subr.mxu0 0.0
  %432 = vmatpush1.msra.mxu0 0.0
  %433 = vmatprep.subr.mxu0 0.0
  %434 = vmatpush1.msra.mxu0 0.0
  %435 = vmatprep.subr.mxu0 0.0
  %436 = vmatpush1.msra.mxu0 0.0
  %437 = vmatprep.subr.mxu0 0.0
  %438 = vmatpush1.msra.mxu0 0.0
  %439 = vmatprep.subr.mxu0 0.0
  %440 = vmatpush1.msra.mxu0 0.0
  %441 = vmatprep.subr.mxu0 0.0
  %442 = vmatpush1.msra.mxu0 0.0
  %443 = vmatprep.subr.mxu0 0.0
  %444 = vmatpush1.msra.mxu0 0.0
  %445 = vmatprep.subr.mxu0 0.0
  %446 = vmatpush1.msra.mxu0 0.0
  %447 = vmatprep.subr.mxu0 0.0
  %448 = vmatpush1.msra.mxu0 0.0
  %449 = vmatprep.subr.mxu0 0.0
  %450 = vmatpush1.msra.mxu0 0.0
  %451 = vmatprep.mubr.f32.mxu0 0.0
  %452 = vmatmul.mubr.f32.gmra.mrb[0].mxu0 %v372
  %v453 = vpop.f32.mrb[0].mxu0
  %v454 = vadd.f32 0.0, %v453
  %v455 = vpop.f32.mrb[0].mxu0
  %v456 = vadd.f32 0.0, %v455
  %457 = vdwg.mxu0
  %458 = vmatprep.subr.mxu0 %v353
  %459 = vmatpush1.msra.mxu0 %v352
  %460 = vmatprep.subr.mxu0 %v357
  %461 = vmatpush1.msra.mxu0 %v356
  %462 = vmatprep.subr.mxu0 %v361
  %463 = vmatpush1.msra.mxu0 %v360
  %464 = vmatprep.subr.mxu0 %v365
  %465 = vmatpush1.msra.mxu0 %v364
  %466 = vmatprep.subr.mxu0 %v385
  %467 = vmatpush1.msra.mxu0 %v382
  %468 = vmatprep.subr.mxu0 0.0
  %469 = vmatpush1.msra.mxu0 0.0
  %470 = vmatprep.subr.mxu0 0.0
  %471 = vmatpush1.msra.mxu0 0.0
  %472 = vmatprep.subr.mxu0 0.0
  %473 = vmatpush1.msra.mxu0 0.0
  %474 = vmatprep.subr.mxu0 0.0
  %475 = vmatpush1.msra.mxu0 0.0
  %476 = vmatprep.subr.mxu0 0.0
  %477 = vmatpush1.msra.mxu0 0.0
  %478 = vmatprep.subr.mxu0 0.0
  %479 = vmatpush1.msra.mxu0 0.0
  %480 = vmatprep.subr.mxu0 0.0
  %481 = vmatpush1.msra.mxu0 0.0
  %482 = vmatprep.subr.mxu0 0.0
  %483 = vmatpush1.msra.mxu0 0.0
  %484 = vmatprep.subr.mxu0 0.0
  %485 = vmatpush1.msra.mxu0 0.0
  %486 = vmatprep.subr.mxu0 0.0
  %487 = vmatpush1.msra.mxu0 0.0
  %488 = vmatprep.subr.mxu0 0.0
  %489 = vmatpush1.msra.mxu0 0.0
  %490 = vmatprep.subr.mxu0 0.0
  %491 = vmatpush1.msra.mxu0 0.0
  %492 = vmatprep.subr.mxu0 0.0
  %493 = vmatpush1.msra.mxu0 0.0
  %494 = vmatprep.subr.mxu0 0.0
  %495 = vmatpush1.msra.mxu0 0.0
  %496 = vmatprep.subr.mxu0 0.0
  %497 = vmatpush1.msra.mxu0 0.0
  %498 = vmatprep.subr.mxu0 0.0
  %499 = vmatpush1.msra.mxu0 0.0
  %500 = vmatprep.subr.mxu0 0.0
  %501 = vmatpush1.msra.mxu0 0.0
  %502 = vmatprep.subr.mxu0 0.0
  %503 = vmatpush1.msra.mxu0 0.0
  %504 = vmatprep.subr.mxu0 0.0
  %505 = vmatpush1.msra.mxu0 0.0
  %506 = vmatprep.subr.mxu0 0.0
  %507 = vmatpush1.msra.mxu0 0.0
  %508 = vmatprep.subr.mxu0 0.0
  %509 = vmatpush1.msra.mxu0 0.0
  %510 = vmatprep.subr.mxu0 0.0
  %511 = vmatpush1.msra.mxu0 0.0
  %512 = vmatprep.subr.mxu0 0.0
  %513 = vmatpush1.msra.mxu0 0.0
  %514 = vmatprep.subr.mxu0 0.0
  %515 = vmatpush1.msra.mxu0 0.0
  %516 = vmatprep.subr.mxu0 0.0
  %517 = vmatpush1.msra.mxu0 0.0
  %518 = vmatprep.subr.mxu0 0.0
  %519 = vmatpush1.msra.mxu0 0.0
  %520 = vmatprep.subr.mxu0 0.0
  %521 = vmatpush1.msra.mxu0 0.0
  %522 = vmatprep.mubr.f32.mxu0 0.0
  %523 = vmatmul.mubr.f32.gmra.mrb[0].mxu0 %v372
  %v524 = vpop.f32.mrb[0].mxu0
  %v525 = vadd.f32 0.0, %v524
  %v526 = vpop.f32.mrb[0].mxu0
  %v527 = vadd.f32 0.0, %v526
  %528 = vdwg.mxu0
  %v529 = vmax.f32 %v454, 0.0
  %v530 = vmax.f32 %v456, 0.0
  %v531 = vmax.f32 %v525, 0.0
  %v532 = vmax.f32 %v527, 0.0
  %533 = vrot.lane.b32.xlu0 %v529, 17
  %v534 = vpop.permute.xlu0 %533
  %535 = vrot.lane.b32.xlu0 %v530, 17
  %v536 = vpop.permute.xlu0 %535
  %537 = vrot.lane.b32.xlu0 %v531, 17
  %v538 = vpop.permute.xlu0 %537
  %539 = vrot.lane.b32.xlu0 %v532, 17
  %v540 = vpop.permute.xlu0 %539
  %v541 = vsel %vm45, %v538, %v540
  %v542 = vsel %vm45, %v536, %v538
  %v543 = vsel %vm45, %v534, %v536
  %v544 = vsel %vm45, %v540, %v534
  %v545 = vmul.f32 %v544, %v53
  %v546 = vmul.f32 %v543, %v57
  %v547 = vmul.f32 %v542, %v61
  %v548 = vmul.f32 %v541, %v65
  %549 = vrot.lane.b32.xlu0 %v529, 16
  %v550 = vpop.permute.xlu0 %549
  %551 = vrot.lane.b32.xlu0 %v530, 16
  %v552 = vpop.permute.xlu0 %551
  %553 = vrot.lane.b32.xlu0 %v531, 16
  %v554 = vpop.permute.xlu0 %553
  %555 = vrot.lane.b32.xlu0 %v532, 16
  %v556 = vpop.permute.xlu0 %555
  %v557 = vsel %vm78, %v554, %v556
  %v558 = vsel %vm78, %v552, %v554
  %v559 = vsel %vm78, %v550, %v552
  %v560 = vsel %vm78, %v556, %v550
  %v561 = vmul.f32 %v560, %v86
  %v562 = vmul.f32 %v559, %v90
  %v563 = vmul.f32 %v558, %v94
  %v564 = vmul.f32 %v557, %v98
  %565 = vrot.lane.b32.xlu0 %v529, 15
  %v566 = vpop.permute.xlu0 %565
  %567 = vrot.lane.b32.xlu0 %v530, 15
  %v568 = vpop.permute.xlu0 %567
  %569 = vrot.lane.b32.xlu0 %v531, 15
  %v570 = vpop.permute.xlu0 %569
  %571 = vrot.lane.b32.xlu0 %v532, 15
  %v572 = vpop.permute.xlu0 %571
  %v573 = vsel %vm111, %v570, %v572
  %v574 = vsel %vm111, %v568, %v570
  %v575 = vsel %vm111, %v566, %v568
  %v576 = vsel %vm111, %v572, %v566
  %v577 = vmul.f32 %v576, %v119
  %v578 = vmul.f32 %v575, %v123
  %v579 = vmul.f32 %v574, %v127
  %v580 = vmul.f32 %v573, %v131
  %581 = vrot.lane.b32.xlu0 %v529, 1
  %v582 = vpop.permute.xlu0 %581
  %583 = vrot.lane.b32.xlu0 %v530, 1
  %v584 = vpop.permute.xlu0 %583
  %585 = vrot.lane.b32.xlu0 %v531, 1
  %v586 = vpop.permute.xlu0 %585
  %587 = vrot.lane.b32.xlu0 %v532, 1
  %v588 = vpop.permute.xlu0 %587
  %v589 = vsel %vm144, %v586, %v588
  %v590 = vsel %vm144, %v584, %v586
  %v591 = vsel %vm144, %v582, %v584
  %v592 = vsel %vm144, %v588, %v582
  %v593 = vmul.f32 %v592, %v152
  %v594 = vmul.f32 %v591, %v156
  %v595 = vmul.f32 %v590, %v160
  %v596 = vmul.f32 %v589, %v164
  %597 = vrot.lane.b32.xlu0 %v529, 127
  %v598 = vpop.permute.xlu0 %597
  %599 = vrot.lane.b32.xlu0 %v530, 127
  %v600 = vpop.permute.xlu0 %599
  %601 = vrot.lane.b32.xlu0 %v531, 127
  %v602 = vpop.permute.xlu0 %601
  %603 = vrot.lane.b32.xlu0 %v532, 127
  %v604 = vpop.permute.xlu0 %603
  %v605 = vsel %vm177, %v602, %v604
  %v606 = vsel %vm177, %v600, %v602
  %v607 = vsel %vm177, %v598, %v600
  %v608 = vsel %vm177, %v604, %v598
  %v609 = vmul.f32 %v607, %v185
  %v610 = vmul.f32 %v606, %v189
  %v611 = vmul.f32 %v605, %v193
  %v612 = vmul.f32 %v608, %v197
  %613 = vrot.lane.b32.xlu0 %v529, 113
  %v614 = vpop.permute.xlu0 %613
  %615 = vrot.lane.b32.xlu0 %v530, 113
  %v616 = vpop.permute.xlu0 %615
  %617 = vrot.lane.b32.xlu0 %v531, 113
  %v618 = vpop.permute.xlu0 %617
  %619 = vrot.lane.b32.xlu0 %v532, 113
  %v620 = vpop.permute.xlu0 %619
  %v621 = vsel %vm210, %v618, %v620
  %v622 = vsel %vm210, %v616, %v618
  %v623 = vsel %vm210, %v614, %v616
  %v624 = vsel %vm210, %v620, %v614
  %v625 = vmul.f32 %v623, %v218
  %v626 = vmul.f32 %v622, %v222
  %v627 = vmul.f32 %v621, %v226
  %v628 = vmul.f32 %v624, %v230
  %629 = vrot.lane.b32.xlu0 %v529, 112
  %v630 = vpop.permute.xlu0 %629
  %631 = vrot.lane.b32.xlu0 %v530, 112
  %v632 = vpop.permute.xlu0 %631
  %633 = vrot.lane.b32.xlu0 %v531, 112
  %v634 = vpop.permute.xlu0 %633
  %635 = vrot.lane.b32.xlu0 %v532, 112
  %v636 = vpop.permute.xlu0 %635
  %v637 = vsel %vm243, %v634, %v636
  %v638 = vsel %vm243, %v632, %v634
  %v639 = vsel %vm243, %v630, %v632
  %v640 = vsel %vm243, %v636, %v630
  %v641 = vmul.f32 %v639, %v251
  %v642 = vmul.f32 %v638, %v255
  %v643 = vmul.f32 %v637, %v259
  %v644 = vmul.f32 %v640, %v263
  %645 = vrot.lane.b32.xlu0 %v529, 111
  %v646 = vpop.permute.xlu0 %645
  %647 = vrot.lane.b32.xlu0 %v530, 111
  %v648 = vpop.permute.xlu0 %647
  %649 = vrot.lane.b32.xlu0 %v531, 111
  %v650 = vpop.permute.xlu0 %649
  %651 = vrot.lane.b32.xlu0 %v532, 111
  %v652 = vpop.permute.xlu0 %651
  %v653 = vsel %vm276, %v650, %v652
  %v654 = vsel %vm276, %v648, %v650
  %v655 = vsel %vm276, %v646, %v648
  %v656 = vsel %vm276, %v652, %v646
  %v657 = vmul.f32 %v655, %v284
  %v658 = vmul.f32 %v654, %v288
  %v659 = vmul.f32 %v653, %v292
  %v660 = vmul.f32 %v656, %v296
  %v665 = vrot.slane %v561, 4
  %v666 = vrot.slane %v562, 4
  %v667 = vrot.slane %v563, 4
  %v668 = vrot.slane %v564, 4
  %v677 = vrot.slane %v593, 4
  %v678 = vrot.slane %v594, 4
  %v679 = vrot.slane %v595, 4
  %v680 = vrot.slane %v596, 4
  %v689 = vrot.slane %v609, 4
  %v690 = vrot.slane %v610, 4
  %v691 = vrot.slane %v611, 4
  %v692 = vrot.slane %v612, 4
  %v701 = vrot.slane %v641, 4
  %v702 = vrot.slane %v642, 4
  %v703 = vrot.slane %v643, 4
  %v704 = vrot.slane %v644, 4
  %v709 = vsel %vm349, %v545, %v665
  %v710 = vsel %vm349, %v546, %v666
  %v711 = vsel %vm349, %v547, %v667
  %v712 = vsel %vm349, %v548, %v668
  %v713 = vsel %vm349, %v577, %v677
  %v714 = vsel %vm349, %v578, %v678
  %v715 = vsel %vm349, %v579, %v679
  %v716 = vsel %vm349, %v580, %v680
  %v717 = vsel %vm349, %v529, %v689
  %v718 = vsel %vm349, %v530, %v690
  %v719 = vsel %vm349, %v531, %v691
  %v720 = vsel %vm349, %v532, %v692
  %v721 = vsel %vm349, %v625, %v701
  %v722 = vsel %vm349, %v626, %v702
  %v723 = vsel %vm349, %v627, %v703
  %v724 = vsel %vm349, %v628, %v704
  %v725 = vsel %vm349, %v657, 1.0
  %v726 = vsel %vm349, %v658, 1.0
  %v727 = vsel %vm349, %v659, 1.0
  %v728 = vsel %vm349, %v660, 1.0
  %v730 = vsel %vm370, %v28, 0
  %v733 = vsel %vm374, %v725, 0
  %v736 = vsel %vm374, %v726, 0
  %v739 = vsel %vm374, %v727, 0
  %v742 = vsel %vm374, %v728, 0
  %744 = vmatprep.subr.mxu0 %v710
  %745 = vmatpush1.msra.mxu0 %v709
  %746 = vmatprep.subr.mxu0 %v714
  %747 = vmatpush1.msra.mxu0 %v713
  %748 = vmatprep.subr.mxu0 %v718
  %749 = vmatpush1.msra.mxu0 %v717
  %750 = vmatprep.subr.mxu0 %v722
  %751 = vmatpush1.msra.mxu0 %v721
  %752 = vmatprep.subr.mxu0 %v736
  %753 = vmatpush1.msra.mxu0 %v733
  %754 = vmatprep.subr.mxu0 0.0
  %755 = vmatpush1.msra.mxu0 0.0
  %756 = vmatprep.subr.mxu0 0.0
  %757 = vmatpush1.msra.mxu0 0.0
  %758 = vmatprep.subr.mxu0 0.0
  %759 = vmatpush1.msra.mxu0 0.0
  %760 = vmatprep.subr.mxu0 0.0
  %761 = vmatpush1.msra.mxu0 0.0
  %762 = vmatprep.subr.mxu0 0.0
  %763 = vmatpush1.msra.mxu0 0.0
  %764 = vmatprep.subr.mxu0 0.0
  %765 = vmatpush1.msra.mxu0 0.0
  %766 = vmatprep.subr.mxu0 0.0
  %767 = vmatpush1.msra.mxu0 0.0
  %768 = vmatprep.subr.mxu0 0.0
  %769 = vmatpush1.msra.mxu0 0.0
  %770 = vmatprep.subr.mxu0 0.0
  %771 = vmatpush1.msra.mxu0 0.0
  %772 = vmatprep.subr.mxu0 0.0
  %773 = vmatpush1.msra.mxu0 0.0
  %774 = vmatprep.subr.mxu0 0.0
  %775 = vmatpush1.msra.mxu0 0.0
  %776 = vmatprep.subr.mxu0 0.0
  %777 = vmatpush1.msra.mxu0 0.0
  %778 = vmatprep.subr.mxu0 0.0
  %779 = vmatpush1.msra.mxu0 0.0
  %780 = vmatprep.subr.mxu0 0.0
  %781 = vmatpush1.msra.mxu0 0.0
  %782 = vmatprep.subr.mxu0 0.0
  %783 = vmatpush1.msra.mxu0 0.0
  %784 = vmatprep.subr.mxu0 0.0
  %785 = vmatpush1.msra.mxu0 0.0
  %786 = vmatprep.subr.mxu0 0.0
  %787 = vmatpush1.msra.mxu0 0.0
  %788 = vmatprep.subr.mxu0 0.0
  %789 = vmatpush1.msra.mxu0 0.0
  %790 = vmatprep.subr.mxu0 0.0
  %791 = vmatpush1.msra.mxu0 0.0
  %792 = vmatprep.subr.mxu0 0.0
  %793 = vmatpush1.msra.mxu0 0.0
  %794 = vmatprep.subr.mxu0 0.0
  %795 = vmatpush1.msra.mxu0 0.0
  %796 = vmatprep.subr.mxu0 0.0
  %797 = vmatpush1.msra.mxu0 0.0
  %798 = vmatprep.subr.mxu0 0.0
  %799 = vmatpush1.msra.mxu0 0.0
  %800 = vmatprep.subr.mxu0 0.0
  %801 = vmatpush1.msra.mxu0 0.0
  %802 = vmatprep.subr.mxu0 0.0
  %803 = vmatpush1.msra.mxu0 0.0
  %804 = vmatprep.subr.mxu0 0.0
  %805 = vmatpush1.msra.mxu0 0.0
  %806 = vmatprep.subr.mxu0 0.0
  %807 = vmatpush1.msra.mxu0 0.0
  %808 = vmatprep.mubr.f32.mxu0 0.0
  %809 = vmatmul.mubr.f32.gmra.mrb[0].mxu0 %v730
  %v810 = vpop.f32.mrb[0].mxu0
  %v811 = vadd.f32 0.0, %v810
  %v812 = vpop.f32.mrb[0].mxu0
  %v813 = vadd.f32 0.0, %v812
  %814 = vdwg.mxu0
  %815 = vmatprep.subr.mxu0 %v712
  %816 = vmatpush1.msra.mxu0 %v711
  %817 = vmatprep.subr.mxu0 %v716
  %818 = vmatpush1.msra.mxu0 %v715
  %819 = vmatprep.subr.mxu0 %v720
  %820 = vmatpush1.msra.mxu0 %v719
  %821 = vmatprep.subr.mxu0 %v724
  %822 = vmatpush1.msra.mxu0 %v723
  %823 = vmatprep.subr.mxu0 %v742
  %824 = vmatpush1.msra.mxu0 %v739
  %825 = vmatprep.subr.mxu0 0.0
  %826 = vmatpush1.msra.mxu0 0.0
  %827 = vmatprep.subr.mxu0 0.0
  %828 = vmatpush1.msra.mxu0 0.0
  %829 = vmatprep.subr.mxu0 0.0
  %830 = vmatpush1.msra.mxu0 0.0
  %831 = vmatprep.subr.mxu0 0.0
  %832 = vmatpush1.msra.mxu0 0.0
  %833 = vmatprep.subr.mxu0 0.0
  %834 = vmatpush1.msra.mxu0 0.0
  %835 = vmatprep.subr.mxu0 0.0
  %836 = vmatpush1.msra.mxu0 0.0
  %837 = vmatprep.subr.mxu0 0.0
  %838 = vmatpush1.msra.mxu0 0.0
  %839 = vmatprep.subr.mxu0 0.0
  %840 = vmatpush1.msra.mxu0 0.0
  %841 = vmatprep.subr.mxu0 0.0
  %842 = vmatpush1.msra.mxu0 0.0
  %843 = vmatprep.subr.mxu0 0.0
  %844 = vmatpush1.msra.mxu0 0.0
  %845 = vmatprep.subr.mxu0 0.0
  %846 = vmatpush1.msra.mxu0 0.0
  %847 = vmatprep.subr.mxu0 0.0
  %848 = vmatpush1.msra.mxu0 0.0
  %849 = vmatprep.subr.mxu0 0.0
  %850 = vmatpush1.msra.mxu0 0.0
  %851 = vmatprep.subr.mxu0 0.0
  %852 = vmatpush1.msra.mxu0 0.0
  %853 = vmatprep.subr.mxu0 0.0
  %854 = vmatpush1.msra.mxu0 0.0
  %855 = vmatprep.subr.mxu0 0.0
  %856 = vmatpush1.msra.mxu0 0.0
  %857 = vmatprep.subr.mxu0 0.0
  %858 = vmatpush1.msra.mxu0 0.0
  %859 = vmatprep.subr.mxu0 0.0
  %860 = vmatpush1.msra.mxu0 0.0
  %861 = vmatprep.subr.mxu0 0.0
  %862 = vmatpush1.msra.mxu0 0.0
  %863 = vmatprep.subr.mxu0 0.0
  %864 = vmatpush1.msra.mxu0 0.0
  %865 = vmatprep.subr.mxu0 0.0
  %866 = vmatpush1.msra.mxu0 0.0
  %867 = vmatprep.subr.mxu0 0.0
  %868 = vmatpush1.msra.mxu0 0.0
  %869 = vmatprep.subr.mxu0 0.0
  %870 = vmatpush1.msra.mxu0 0.0
  %871 = vmatprep.subr.mxu0 0.0
  %872 = vmatpush1.msra.mxu0 0.0
  %873 = vmatprep.subr.mxu0 0.0
  %874 = vmatpush1.msra.mxu0 0.0
  %875 = vmatprep.subr.mxu0 0.0
  %876 = vmatpush1.msra.mxu0 0.0
  %877 = vmatprep.subr.mxu0 0.0
  %878 = vmatpush1.msra.mxu0 0.0
  %879 = vmatprep.mubr.f32.mxu0 0.0
  %880 = vmatmul.mubr.f32.gmra.mrb[0].mxu0 %v730
  %v881 = vpop.f32.mrb[0].mxu0
  %v882 = vadd.f32 0.0, %v881
  %v883 = vpop.f32.mrb[0].mxu0
  %v884 = vadd.f32 0.0, %v883
  %885 = vdwg.mxu0
  %v890 = vcombine.low %v811, %v813
  %v891 = vcombine.low %v882, %v884
  %v894 = vadd.f32 %v25, %v890
  %v895 = vadd.f32 %v26, %v891
  %v896 = vmax.f32 %v894, 0.0
  %v897 = vmax.f32 %v895, 0.0
  %s898 = scalar_lea.vmem %s2, 4
  %v899 = vld [vmem:[%s898] sm:$0xf]
  %s900 = scalar_lea.vmem %s3, 4
  %v901 = vld [vmem:[%s900] sm:$0xf]
  %v904 = vcombine.high %v896, %v896
  %v905 = vcombine.high %v897, %v897
  %908 = vrot.lane.b32.xlu0 %v896, 17
  %v909 = vpop.permute.xlu0 %908
  %910 = vrot.lane.b32.xlu0 %v904, 17
  %v911 = vpop.permute.xlu0 %910
  %912 = vrot.lane.b32.xlu0 %v897, 17
  %v913 = vpop.permute.xlu0 %912
  %914 = vrot.lane.b32.xlu0 %v905, 17
  %v915 = vpop.permute.xlu0 %914
  %v916 = vsel %vm45, %v913, %v915
  %v917 = vsel %vm45, %v911, %v913
  %v918 = vsel %vm45, %v909, %v911
  %v919 = vsel %vm45, %v915, %v909
  %v920 = vmul.f32 %v919, %v53
  %v921 = vmul.f32 %v918, %v57
  %v922 = vmul.f32 %v917, %v61
  %v923 = vmul.f32 %v916, %v65
  %924 = vrot.lane.b32.xlu0 %v896, 16
  %v925 = vpop.permute.xlu0 %924
  %926 = vrot.lane.b32.xlu0 %v904, 16
  %v927 = vpop.permute.xlu0 %926
  %928 = vrot.lane.b32.xlu0 %v897, 16
  %v929 = vpop.permute.xlu0 %928
  %930 = vrot.lane.b32.xlu0 %v905, 16
  %v931 = vpop.permute.xlu0 %930
  %v932 = vsel %vm78, %v929, %v931
  %v933 = vsel %vm78, %v927, %v929
  %v934 = vsel %vm78, %v925, %v927
  %v935 = vsel %vm78, %v931, %v925
  %v936 = vmul.f32 %v935, %v86
  %v937 = vmul.f32 %v934, %v90
  %v938 = vmul.f32 %v933, %v94
  %v939 = vmul.f32 %v932, %v98
  %940 = vrot.lane.b32.xlu0 %v896, 15
  %v941 = vpop.permute.xlu0 %940
  %942 = vrot.lane.b32.xlu0 %v904, 15
  %v943 = vpop.permute.xlu0 %942
  %944 = vrot.lane.b32.xlu0 %v897, 15
  %v945 = vpop.permute.xlu0 %944
  %946 = vrot.lane.b32.xlu0 %v905, 15
  %v947 = vpop.permute.xlu0 %946
  %v948 = vsel %vm111, %v945, %v947
  %v949 = vsel %vm111, %v943, %v945
  %v950 = vsel %vm111, %v941, %v943
  %v951 = vsel %vm111, %v947, %v941
  %v952 = vmul.f32 %v951, %v119
  %v953 = vmul.f32 %v950, %v123
  %v954 = vmul.f32 %v949, %v127
  %v955 = vmul.f32 %v948, %v131
  %956 = vrot.lane.b32.xlu0 %v896, 1
  %v957 = vpop.permute.xlu0 %956
  %958 = vrot.lane.b32.xlu0 %v904, 1
  %v959 = vpop.permute.xlu0 %958
  %960 = vrot.lane.b32.xlu0 %v897, 1
  %v961 = vpop.permute.xlu0 %960
  %962 = vrot.lane.b32.xlu0 %v905, 1
  %v963 = vpop.permute.xlu0 %962
  %v964 = vsel %vm144, %v961, %v963
  %v965 = vsel %vm144, %v959, %v961
  %v966 = vsel %vm144, %v957, %v959
  %v967 = vsel %vm144, %v963, %v957
  %v968 = vmul.f32 %v967, %v152
  %v969 = vmul.f32 %v966, %v156
  %v970 = vmul.f32 %v965, %v160
  %v971 = vmul.f32 %v964, %v164
  %972 = vrot.lane.b32.xlu0 %v896, 127
  %v973 = vpop.permute.xlu0 %972
  %974 = vrot.lane.b32.xlu0 %v904, 127
  %v975 = vpop.permute.xlu0 %974
  %976 = vrot.lane.b32.xlu0 %v897, 127
  %v977 = vpop.permute.xlu0 %976
  %978 = vrot.lane.b32.xlu0 %v905, 127
  %v979 = vpop.permute.xlu0 %978
  %v980 = vsel %vm177, %v977, %v979
  %v981 = vsel %vm177, %v975, %v977
  %v982 = vsel %vm177, %v973, %v975
  %v983 = vsel %vm177, %v979, %v973
  %v984 = vmul.f32 %v982, %v185
  %v985 = vmul.f32 %v981, %v189
  %v986 = vmul.f32 %v980, %v193
  %v987 = vmul.f32 %v983, %v197
  %988 = vrot.lane.b32.xlu0 %v896, 113
  %v989 = vpop.permute.xlu0 %988
  %990 = vrot.lane.b32.xlu0 %v904, 113
  %v991 = vpop.permute.xlu0 %990
  %992 = vrot.lane.b32.xlu0 %v897, 113
  %v993 = vpop.permute.xlu0 %992
  %994 = vrot.lane.b32.xlu0 %v905, 113
  %v995 = vpop.permute.xlu0 %994
  %v996 = vsel %vm210, %v993, %v995
  %v997 = vsel %vm210, %v991, %v993
  %v998 = vsel %vm210, %v989, %v991
  %v999 = vsel %vm210, %v995, %v989
  %v1000 = vmul.f32 %v998, %v218
  %v1001 = vmul.f32 %v997, %v222
  %v1002 = vmul.f32 %v996, %v226
  %v1003 = vmul.f32 %v999, %v230
  %1004 = vrot.lane.b32.xlu0 %v896, 112
  %v1005 = vpop.permute.xlu0 %1004
  %1006 = vrot.lane.b32.xlu0 %v904, 112
  %v1007 = vpop.permute.xlu0 %1006
  %1008 = vrot.lane.b32.xlu0 %v897, 112
  %v1009 = vpop.permute.xlu0 %1008
  %1010 = vrot.lane.b32.xlu0 %v905, 112
  %v1011 = vpop.permute.xlu0 %1010
  %v1012 = vsel %vm243, %v1009, %v1011
  %v1013 = vsel %vm243, %v1007, %v1009
  %v1014 = vsel %vm243, %v1005, %v1007
  %v1015 = vsel %vm243, %v1011, %v1005
  %v1016 = vmul.f32 %v1014, %v251
  %v1017 = vmul.f32 %v1013, %v255
  %v1018 = vmul.f32 %v1012, %v259
  %v1019 = vmul.f32 %v1015, %v263
  %1020 = vrot.lane.b32.xlu0 %v896, 111
  %v1021 = vpop.permute.xlu0 %1020
  %1022 = vrot.lane.b32.xlu0 %v904, 111
  %v1023 = vpop.permute.xlu0 %1022
  %1024 = vrot.lane.b32.xlu0 %v897, 111
  %v1025 = vpop.permute.xlu0 %1024
  %1026 = vrot.lane.b32.xlu0 %v905, 111
  %v1027 = vpop.permute.xlu0 %1026
  %v1028 = vsel %vm276, %v1025, %v1027
  %v1029 = vsel %vm276, %v1023, %v1025
  %v1030 = vsel %vm276, %v1021, %v1023
  %v1031 = vsel %vm276, %v1027, %v1021
  %v1032 = vmul.f32 %v1030, %v284
  %v1033 = vmul.f32 %v1029, %v288
  %v1034 = vmul.f32 %v1028, %v292
  %v1035 = vmul.f32 %v1031, %v296
  %v1040 = vrot.slane %v936, 4
  %v1041 = vrot.slane %v937, 4
  %v1042 = vrot.slane %v938, 4
  %v1043 = vrot.slane %v939, 4
  %v1052 = vrot.slane %v968, 4
  %v1053 = vrot.slane %v969, 4
  %v1054 = vrot.slane %v970, 4
  %v1055 = vrot.slane %v971, 4
  %v1064 = vrot.slane %v984, 4
  %v1065 = vrot.slane %v985, 4
  %v1066 = vrot.slane %v986, 4
  %v1067 = vrot.slane %v987, 4
  %v1076 = vrot.slane %v1016, 4
  %v1077 = vrot.slane %v1017, 4
  %v1078 = vrot.slane %v1018, 4
  %v1079 = vrot.slane %v1019, 4
  %v1084 = vsel %vm349, %v920, %v1040
  %v1085 = vsel %vm349, %v921, %v1041
  %v1086 = vsel %vm349, %v922, %v1042
  %v1087 = vsel %vm349, %v923, %v1043
  %v1088 = vsel %vm349, %v952, %v1052
  %v1089 = vsel %vm349, %v953, %v1053
  %v1090 = vsel %vm349, %v954, %v1054
  %v1091 = vsel %vm349, %v955, %v1055
  %v1092 = vsel %vm349, %v896, %v1064
  %v1093 = vsel %vm349, %v904, %v1065
  %v1094 = vsel %vm349, %v897, %v1066
  %v1095 = vsel %vm349, %v905, %v1067
  %v1096 = vsel %vm349, %v1000, %v1076
  %v1097 = vsel %vm349, %v1001, %v1077
  %v1098 = vsel %vm349, %v1002, %v1078
  %v1099 = vsel %vm349, %v1003, %v1079
  %v1100 = vsel %vm349, %v1032, 1.0
  %v1101 = vsel %vm349, %v1033, 1.0
  %v1102 = vsel %vm349, %v1034, 1.0
  %v1103 = vsel %vm349, %v1035, 1.0
  %v1105 = vsel %vm370, %v899, 0
  %v1108 = vsel %vm374, %v1100, 0
  %v1111 = vsel %vm374, %v1101, 0
  %v1114 = vsel %vm374, %v1102, 0
  %v1117 = vsel %vm374, %v1103, 0
  %1119 = vmatprep.subr.mxu0 %v1085
  %1120 = vmatpush1.msra.mxu0 %v1084
  %1121 = vmatprep.subr.mxu0 %v1089
  %1122 = vmatpush1.msra.mxu0 %v1088
  %1123 = vmatprep.subr.mxu0 %v1093
  %1124 = vmatpush1.msra.mxu0 %v1092
  %1125 = vmatprep.subr.mxu0 %v1097
  %1126 = vmatpush1.msra.mxu0 %v1096
  %1127 = vmatprep.subr.mxu0 %v1111
  %1128 = vmatpush1.msra.mxu0 %v1108
  %1129 = vmatprep.subr.mxu0 0.0
  %1130 = vmatpush1.msra.mxu0 0.0
  %1131 = vmatprep.subr.mxu0 0.0
  %1132 = vmatpush1.msra.mxu0 0.0
  %1133 = vmatprep.subr.mxu0 0.0
  %1134 = vmatpush1.msra.mxu0 0.0
  %1135 = vmatprep.subr.mxu0 0.0
  %1136 = vmatpush1.msra.mxu0 0.0
  %1137 = vmatprep.subr.mxu0 0.0
  %1138 = vmatpush1.msra.mxu0 0.0
  %1139 = vmatprep.subr.mxu0 0.0
  %1140 = vmatpush1.msra.mxu0 0.0
  %1141 = vmatprep.subr.mxu0 0.0
  %1142 = vmatpush1.msra.mxu0 0.0
  %1143 = vmatprep.subr.mxu0 0.0
  %1144 = vmatpush1.msra.mxu0 0.0
  %1145 = vmatprep.subr.mxu0 0.0
  %1146 = vmatpush1.msra.mxu0 0.0
  %1147 = vmatprep.subr.mxu0 0.0
  %1148 = vmatpush1.msra.mxu0 0.0
  %1149 = vmatprep.subr.mxu0 0.0
  %1150 = vmatpush1.msra.mxu0 0.0
  %1151 = vmatprep.subr.mxu0 0.0
  %1152 = vmatpush1.msra.mxu0 0.0
  %1153 = vmatprep.subr.mxu0 0.0
  %1154 = vmatpush1.msra.mxu0 0.0
  %1155 = vmatprep.subr.mxu0 0.0
  %1156 = vmatpush1.msra.mxu0 0.0
  %1157 = vmatprep.subr.mxu0 0.0
  %1158 = vmatpush1.msra.mxu0 0.0
  %1159 = vmatprep.subr.mxu0 0.0
  %1160 = vmatpush1.msra.mxu0 0.0
  %1161 = vmatprep.subr.mxu0 0.0
  %1162 = vmatpush1.msra.mxu0 0.0
  %1163 = vmatprep.subr.mxu0 0.0
  %1164 = vmatpush1.msra.mxu0 0.0
  %1165 = vmatprep.subr.mxu0 0.0
  %1166 = vmatpush1.msra.mxu0 0.0
  %1167 = vmatprep.subr.mxu0 0.0
  %1168 = vmatpush1.msra.mxu0 0.0
  %1169 = vmatprep.subr.mxu0 0.0
  %1170 = vmatpush1.msra.mxu0 0.0
  %1171 = vmatprep.subr.mxu0 0.0
  %1172 = vmatpush1.msra.mxu0 0.0
  %1173 = vmatprep.subr.mxu0 0.0
  %1174 = vmatpush1.msra.mxu0 0.0
  %1175 = vmatprep.subr.mxu0 0.0
  %1176 = vmatpush1.msra.mxu0 0.0
  %1177 = vmatprep.subr.mxu0 0.0
  %1178 = vmatpush1.msra.mxu0 0.0
  %1179 = vmatprep.subr.mxu0 0.0
  %1180 = vmatpush1.msra.mxu0 0.0
  %1181 = vmatprep.subr.mxu0 0.0
  %1182 = vmatpush1.msra.mxu0 0.0
  %1183 = vmatprep.mubr.f32.mxu0 0.0
  %1184 = vmatmul.mubr.f32.gmra.mrb[0].mxu0 %v1105
  %v1185 = vpop.f32.mrb[0].mxu0
  %v1186 = vadd.f32 0.0, %v1185
  %v1187 = vpop.f32.mrb[0].mxu0
  %v1188 = vadd.f32 0.0, %v1187
  %1189 = vdwg.mxu0
  %1190 = vmatprep.subr.mxu0 %v1087
  %1191 = vmatpush1.msra.mxu0 %v1086
  %1192 = vmatprep.subr.mxu0 %v1091
  %1193 = vmatpush1.msra.mxu0 %v1090
  %1194 = vmatprep.subr.mxu0 %v1095
  %1195 = vmatpush1.msra.mxu0 %v1094
  %1196 = vmatprep.subr.mxu0 %v1099
  %1197 = vmatpush1.msra.mxu0 %v1098
  %1198 = vmatprep.subr.mxu0 %v1117
  %1199 = vmatpush1.msra.mxu0 %v1114
  %1200 = vmatprep.subr.mxu0 0.0
  %1201 = vmatpush1.msra.mxu0 0.0
  %1202 = vmatprep.subr.mxu0 0.0
  %1203 = vmatpush1.msra.mxu0 0.0
  %1204 = vmatprep.subr.mxu0 0.0
  %1205 = vmatpush1.msra.mxu0 0.0
  %1206 = vmatprep.subr.mxu0 0.0
  %1207 = vmatpush1.msra.mxu0 0.0
  %1208 = vmatprep.subr.mxu0 0.0
  %1209 = vmatpush1.msra.mxu0 0.0
  %1210 = vmatprep.subr.mxu0 0.0
  %1211 = vmatpush1.msra.mxu0 0.0
  %1212 = vmatprep.subr.mxu0 0.0
  %1213 = vmatpush1.msra.mxu0 0.0
  %1214 = vmatprep.subr.mxu0 0.0
  %1215 = vmatpush1.msra.mxu0 0.0
  %1216 = vmatprep.subr.mxu0 0.0
  %1217 = vmatpush1.msra.mxu0 0.0
  %1218 = vmatprep.subr.mxu0 0.0
  %1219 = vmatpush1.msra.mxu0 0.0
  %1220 = vmatprep.subr.mxu0 0.0
  %1221 = vmatpush1.msra.mxu0 0.0
  %1222 = vmatprep.subr.mxu0 0.0
  %1223 = vmatpush1.msra.mxu0 0.0
  %1224 = vmatprep.subr.mxu0 0.0
  %1225 = vmatpush1.msra.mxu0 0.0
  %1226 = vmatprep.subr.mxu0 0.0
  %1227 = vmatpush1.msra.mxu0 0.0
  %1228 = vmatprep.subr.mxu0 0.0
  %1229 = vmatpush1.msra.mxu0 0.0
  %1230 = vmatprep.subr.mxu0 0.0
  %1231 = vmatpush1.msra.mxu0 0.0
  %1232 = vmatprep.subr.mxu0 0.0
  %1233 = vmatpush1.msra.mxu0 0.0
  %1234 = vmatprep.subr.mxu0 0.0
  %1235 = vmatpush1.msra.mxu0 0.0
  %1236 = vmatprep.subr.mxu0 0.0
  %1237 = vmatpush1.msra.mxu0 0.0
  %1238 = vmatprep.subr.mxu0 0.0
  %1239 = vmatpush1.msra.mxu0 0.0
  %1240 = vmatprep.subr.mxu0 0.0
  %1241 = vmatpush1.msra.mxu0 0.0
  %1242 = vmatprep.subr.mxu0 0.0
  %1243 = vmatpush1.msra.mxu0 0.0
  %1244 = vmatprep.subr.mxu0 0.0
  %1245 = vmatpush1.msra.mxu0 0.0
  %1246 = vmatprep.subr.mxu0 0.0
  %1247 = vmatpush1.msra.mxu0 0.0
  %1248 = vmatprep.subr.mxu0 0.0
  %1249 = vmatpush1.msra.mxu0 0.0
  %1250 = vmatprep.subr.mxu0 0.0
  %1251 = vmatpush1.msra.mxu0 0.0
  %1252 = vmatprep.subr.mxu0 0.0
  %1253 = vmatpush1.msra.mxu0 0.0
  %1254 = vmatprep.mubr.f32.mxu0 0.0
  %1255 = vmatmul.mubr.f32.gmra.mrb[0].mxu0 %v1105
  %v1256 = vpop.f32.mrb[0].mxu0
  %v1257 = vadd.f32 0.0, %v1256
  %v1258 = vpop.f32.mrb[0].mxu0
  %v1259 = vadd.f32 0.0, %v1258
  %1260 = vdwg.mxu0
  %v1261 = vmax.f32 %v1186, 0.0
  %v1262 = vmax.f32 %v1188, 0.0
  %v1263 = vmax.f32 %v1257, 0.0
  %v1264 = vmax.f32 %v1259, 0.0
  %1265 = vrot.lane.b32.xlu0 %v1261, 17
  %v1266 = vpop.permute.xlu0 %1265
  %1267 = vrot.lane.b32.xlu0 %v1262, 17
  %v1268 = vpop.permute.xlu0 %1267
  %1269 = vrot.lane.b32.xlu0 %v1263, 17
  %v1270 = vpop.permute.xlu0 %1269
  %1271 = vrot.lane.b32.xlu0 %v1264, 17
  %v1272 = vpop.permute.xlu0 %1271
  %v1273 = vsel %vm45, %v1270, %v1272
  %v1274 = vsel %vm45, %v1268, %v1270
  %v1275 = vsel %vm45, %v1266, %v1268
  %v1276 = vsel %vm45, %v1272, %v1266
  %v1277 = vmul.f32 %v1276, %v53
  %v1278 = vmul.f32 %v1275, %v57
  %v1279 = vmul.f32 %v1274, %v61
  %v1280 = vmul.f32 %v1273, %v65
  %1281 = vrot.lane.b32.xlu0 %v1261, 16
  %v1282 = vpop.permute.xlu0 %1281
  %1283 = vrot.lane.b32.xlu0 %v1262, 16
  %v1284 = vpop.permute.xlu0 %1283
  %1285 = vrot.lane.b32.xlu0 %v1263, 16
  %v1286 = vpop.permute.xlu0 %1285
  %1287 = vrot.lane.b32.xlu0 %v1264, 16
  %v1288 = vpop.permute.xlu0 %1287
  %v1289 = vsel %vm78, %v1286, %v1288
  %v1290 = vsel %vm78, %v1284, %v1286
  %v1291 = vsel %vm78, %v1282, %v1284
  %v1292 = vsel %vm78, %v1288, %v1282
  %v1293 = vmul.f32 %v1292, %v86
  %v1294 = vmul.f32 %v1291, %v90
  %v1295 = vmul.f32 %v1290, %v94
  %v1296 = vmul.f32 %v1289, %v98
  %1297 = vrot.lane.b32.xlu0 %v1261, 15
  %v1298 = vpop.permute.xlu0 %1297
  %1299 = vrot.lane.b32.xlu0 %v1262, 15
  %v1300 = vpop.permute.xlu0 %1299
  %1301 = vrot.lane.b32.xlu0 %v1263, 15
  %v1302 = vpop.permute.xlu0 %1301
  %1303 = vrot.lane.b32.xlu0 %v1264, 15
  %v1304 = vpop.permute.xlu0 %1303
  %v1305 = vsel %vm111, %v1302, %v1304
  %v1306 = vsel %vm111, %v1300, %v1302
  %v1307 = vsel %vm111, %v1298, %v1300
  %v1308 = vsel %vm111, %v1304, %v1298
  %v1309 = vmul.f32 %v1308, %v119
  %v1310 = vmul.f32 %v1307, %v123
  %v1311 = vmul.f32 %v1306, %v127
  %v1312 = vmul.f32 %v1305, %v131
  %1313 = vrot.lane.b32.xlu0 %v1261, 1
  %v1314 = vpop.permute.xlu0 %1313
  %1315 = vrot.lane.b32.xlu0 %v1262, 1
  %v1316 = vpop.permute.xlu0 %1315
  %1317 = vrot.lane.b32.xlu0 %v1263, 1
  %v1318 = vpop.permute.xlu0 %1317
  %1319 = vrot.lane.b32.xlu0 %v1264, 1
  %v1320 = vpop.permute.xlu0 %1319
  %v1321 = vsel %vm144, %v1318, %v1320
  %v1322 = vsel %vm144, %v1316, %v1318
  %v1323 = vsel %vm144, %v1314, %v1316
  %v1324 = vsel %vm144, %v1320, %v1314
  %v1325 = vmul.f32 %v1324, %v152
  %v1326 = vmul.f32 %v1323, %v156
  %v1327 = vmul.f32 %v1322, %v160
  %v1328 = vmul.f32 %v1321, %v164
  %1329 = vrot.lane.b32.xlu0 %v1261, 127
  %v1330 = vpop.permute.xlu0 %1329
  %1331 = vrot.lane.b32.xlu0 %v1262, 127
  %v1332 = vpop.permute.xlu0 %1331
  %1333 = vrot.lane.b32.xlu0 %v1263, 127
  %v1334 = vpop.permute.xlu0 %1333
  %1335 = vrot.lane.b32.xlu0 %v1264, 127
  %v1336 = vpop.permute.xlu0 %1335
  %v1337 = vsel %vm177, %v1334, %v1336
  %v1338 = vsel %vm177, %v1332, %v1334
  %v1339 = vsel %vm177, %v1330, %v1332
  %v1340 = vsel %vm177, %v1336, %v1330
  %v1341 = vmul.f32 %v1339, %v185
  %v1342 = vmul.f32 %v1338, %v189
  %v1343 = vmul.f32 %v1337, %v193
  %v1344 = vmul.f32 %v1340, %v197
  %1345 = vrot.lane.b32.xlu0 %v1261, 113
  %v1346 = vpop.permute.xlu0 %1345
  %1347 = vrot.lane.b32.xlu0 %v1262, 113
  %v1348 = vpop.permute.xlu0 %1347
  %1349 = vrot.lane.b32.xlu0 %v1263, 113
  %v1350 = vpop.permute.xlu0 %1349
  %1351 = vrot.lane.b32.xlu0 %v1264, 113
  %v1352 = vpop.permute.xlu0 %1351
  %v1353 = vsel %vm210, %v1350, %v1352
  %v1354 = vsel %vm210, %v1348, %v1350
  %v1355 = vsel %vm210, %v1346, %v1348
  %v1356 = vsel %vm210, %v1352, %v1346
  %v1357 = vmul.f32 %v1355, %v218
  %v1358 = vmul.f32 %v1354, %v222
  %v1359 = vmul.f32 %v1353, %v226
  %v1360 = vmul.f32 %v1356, %v230
  %1361 = vrot.lane.b32.xlu0 %v1261, 112
  %v1362 = vpop.permute.xlu0 %1361
  %1363 = vrot.lane.b32.xlu0 %v1262, 112
  %v1364 = vpop.permute.xlu0 %1363
  %1365 = vrot.lane.b32.xlu0 %v1263, 112
  %v1366 = vpop.permute.xlu0 %1365
  %1367 = vrot.lane.b32.xlu0 %v1264, 112
  %v1368 = vpop.permute.xlu0 %1367
  %v1369 = vsel %vm243, %v1366, %v1368
  %v1370 = vsel %vm243, %v1364, %v1366
  %v1371 = vsel %vm243, %v1362, %v1364
  %v1372 = vsel %vm243, %v1368, %v1362
  %v1373 = vmul.f32 %v1371, %v251
  %v1374 = vmul.f32 %v1370, %v255
  %v1375 = vmul.f32 %v1369, %v259
  %v1376 = vmul.f32 %v1372, %v263
  %1377 = vrot.lane.b32.xlu0 %v1261, 111
  %v1378 = vpop.permute.xlu0 %1377
  %1379 = vrot.lane.b32.xlu0 %v1262, 111
  %v1380 = vpop.permute.xlu0 %1379
  %1381 = vrot.lane.b32.xlu0 %v1263, 111
  %v1382 = vpop.permute.xlu0 %1381
  %1383 = vrot.lane.b32.xlu0 %v1264, 111
  %v1384 = vpop.permute.xlu0 %1383
  %v1385 = vsel %vm276, %v1382, %v1384
  %v1386 = vsel %vm276, %v1380, %v1382
  %v1387 = vsel %vm276, %v1378, %v1380
  %v1388 = vsel %vm276, %v1384, %v1378
  %v1389 = vmul.f32 %v1387, %v284
  %v1390 = vmul.f32 %v1386, %v288
  %v1391 = vmul.f32 %v1385, %v292
  %v1392 = vmul.f32 %v1388, %v296
  %v1397 = vrot.slane %v1293, 4
  %v1398 = vrot.slane %v1294, 4
  %v1399 = vrot.slane %v1295, 4
  %v1400 = vrot.slane %v1296, 4
  %v1409 = vrot.slane %v1325, 4
  %v1410 = vrot.slane %v1326, 4
  %v1411 = vrot.slane %v1327, 4
  %v1412 = vrot.slane %v1328, 4
  %v1421 = vrot.slane %v1341, 4
  %v1422 = vrot.slane %v1342, 4
  %v1423 = vrot.slane %v1343, 4
  %v1424 = vrot.slane %v1344, 4
  %v1433 = vrot.slane %v1373, 4
  %v1434 = vrot.slane %v1374, 4
  %v1435 = vrot.slane %v1375, 4
  %v1436 = vrot.slane %v1376, 4
  %v1441 = vsel %vm349, %v1277, %v1397
  %v1442 = vsel %vm349, %v1278, %v1398
  %v1443 = vsel %vm349, %v1279, %v1399
  %v1444 = vsel %vm349, %v1280, %v1400
  %v1445 = vsel %vm349, %v1309, %v1409
  %v1446 = vsel %vm349, %v1310, %v1410
  %v1447 = vsel %vm349, %v1311, %v1411
  %v1448 = vsel %vm349, %v1312, %v1412
  %v1449 = vsel %vm349, %v1261, %v1421
  %v1450 = vsel %vm349, %v1262, %v1422
  %v1451 = vsel %vm349, %v1263, %v1423
  %v1452 = vsel %vm349, %v1264, %v1424
  %v1453 = vsel %vm349, %v1357, %v1433
  %v1454 = vsel %vm349, %v1358, %v1434
  %v1455 = vsel %vm349, %v1359, %v1435
  %v1456 = vsel %vm349, %v1360, %v1436
  %v1457 = vsel %vm349, %v1389, 1.0
  %v1458 = vsel %vm349, %v1390, 1.0
  %v1459 = vsel %vm349, %v1391, 1.0
  %v1460 = vsel %vm349, %v1392, 1.0
  %v1462 = vsel %vm370, %v901, 0
  %v1465 = vsel %vm374, %v1457, 0
  %v1468 = vsel %vm374, %v1458, 0
  %v1471 = vsel %vm374, %v1459, 0
  %v1474 = vsel %vm374, %v1460, 0
  %1476 = vmatprep.subr.mxu0 %v1442
  %1477 = vmatpush1.msra.mxu0 %v1441
  %1478 = vmatprep.subr.mxu0 %v1446
  %1479 = vmatpush1.msra.mxu0 %v1445
  %1480 = vmatprep.subr.mxu0 %v1450
  %1481 = vmatpush1.msra.mxu0 %v1449
  %1482 = vmatprep.subr.mxu0 %v1454
  %1483 = vmatpush1.msra.mxu0 %v1453
  %1484 = vmatprep.subr.mxu0 %v1468
  %1485 = vmatpush1.msra.mxu0 %v1465
  %1486 = vmatprep.subr.mxu0 0.0
  %1487 = vmatpush1.msra.mxu0 0.0
  %1488 = vmatprep.subr.mxu0 0.0
  %1489 = vmatpush1.msra.mxu0 0.0
  %1490 = vmatprep.subr.mxu0 0.0
  %1491 = vmatpush1.msra.mxu0 0.0
  %1492 = vmatprep.subr.mxu0 0.0
  %1493 = vmatpush1.msra.mxu0 0.0
  %1494 = vmatprep.subr.mxu0 0.0
  %1495 = vmatpush1.msra.mxu0 0.0
  %1496 = vmatprep.subr.mxu0 0.0
  %1497 = vmatpush1.msra.mxu0 0.0
  %1498 = vmatprep.subr.mxu0 0.0
  %1499 = vmatpush1.msra.mxu0 0.0
  %1500 = vmatprep.subr.mxu0 0.0
  %1501 = vmatpush1.msra.mxu0 0.0
  %1502 = vmatprep.subr.mxu0 0.0
  %1503 = vmatpush1.msra.mxu0 0.0
  %1504 = vmatprep.subr.mxu0 0.0
  %1505 = vmatpush1.msra.mxu0 0.0
  %1506 = vmatprep.subr.mxu0 0.0
  %1507 = vmatpush1.msra.mxu0 0.0
  %1508 = vmatprep.subr.mxu0 0.0
  %1509 = vmatpush1.msra.mxu0 0.0
  %1510 = vmatprep.subr.mxu0 0.0
  %1511 = vmatpush1.msra.mxu0 0.0
  %1512 = vmatprep.subr.mxu0 0.0
  %1513 = vmatpush1.msra.mxu0 0.0
  %1514 = vmatprep.subr.mxu0 0.0
  %1515 = vmatpush1.msra.mxu0 0.0
  %1516 = vmatprep.subr.mxu0 0.0
  %1517 = vmatpush1.msra.mxu0 0.0
  %1518 = vmatprep.subr.mxu0 0.0
  %1519 = vmatpush1.msra.mxu0 0.0
  %1520 = vmatprep.subr.mxu0 0.0
  %1521 = vmatpush1.msra.mxu0 0.0
  %1522 = vmatprep.subr.mxu0 0.0
  %1523 = vmatpush1.msra.mxu0 0.0
  %1524 = vmatprep.subr.mxu0 0.0
  %1525 = vmatpush1.msra.mxu0 0.0
  %1526 = vmatprep.subr.mxu0 0.0
  %1527 = vmatpush1.msra.mxu0 0.0
  %1528 = vmatprep.subr.mxu0 0.0
  %1529 = vmatpush1.msra.mxu0 0.0
  %1530 = vmatprep.subr.mxu0 0.0
  %1531 = vmatpush1.msra.mxu0 0.0
  %1532 = vmatprep.subr.mxu0 0.0
  %1533 = vmatpush1.msra.mxu0 0.0
  %1534 = vmatprep.subr.mxu0 0.0
  %1535 = vmatpush1.msra.mxu0 0.0
  %1536 = vmatprep.subr.mxu0 0.0
  %1537 = vmatpush1.msra.mxu0 0.0
  %1538 = vmatprep.subr.mxu0 0.0
  %1539 = vmatpush1.msra.mxu0 0.0
  %1540 = vmatprep.mubr.f32.mxu0 0.0
  %1541 = vmatmul.mubr.f32.gmra.mrb[0].mxu0 %v1462
  %v1542 = vpop.f32.mrb[0].mxu0
  %v1543 = vadd.f32 0.0, %v1542
  %v1544 = vpop.f32.mrb[0].mxu0
  %v1545 = vadd.f32 0.0, %v1544
  %1546 = vdwg.mxu0
  %1547 = vmatprep.subr.mxu0 %v1444
  %1548 = vmatpush1.msra.mxu0 %v1443
  %1549 = vmatprep.subr.mxu0 %v1448
  %1550 = vmatpush1.msra.mxu0 %v1447
  %1551 = vmatprep.subr.mxu0 %v1452
  %1552 = vmatpush1.msra.mxu0 %v1451
  %1553 = vmatprep.subr.mxu0 %v1456
  %1554 = vmatpush1.msra.mxu0 %v1455
  %1555 = vmatprep.subr.mxu0 %v1474
  %1556 = vmatpush1.msra.mxu0 %v1471
  %1557 = vmatprep.subr.mxu0 0.0
  %1558 = vmatpush1.msra.mxu0 0.0
  %1559 = vmatprep.subr.mxu0 0.0
  %1560 = vmatpush1.msra.mxu0 0.0
  %1561 = vmatprep.subr.mxu0 0.0
  %1562 = vmatpush1.msra.mxu0 0.0
  %1563 = vmatprep.subr.mxu0 0.0
  %1564 = vmatpush1.msra.mxu0 0.0
  %1565 = vmatprep.subr.mxu0 0.0
  %1566 = vmatpush1.msra.mxu0 0.0
  %1567 = vmatprep.subr.mxu0 0.0
  %1568 = vmatpush1.msra.mxu0 0.0
  %1569 = vmatprep.subr.mxu0 0.0
  %1570 = vmatpush1.msra.mxu0 0.0
  %1571 = vmatprep.subr.mxu0 0.0
  %1572 = vmatpush1.msra.mxu0 0.0
  %1573 = vmatprep.subr.mxu0 0.0
  %1574 = vmatpush1.msra.mxu0 0.0
  %1575 = vmatprep.subr.mxu0 0.0
  %1576 = vmatpush1.msra.mxu0 0.0
  %1577 = vmatprep.subr.mxu0 0.0
  %1578 = vmatpush1.msra.mxu0 0.0
  %1579 = vmatprep.subr.mxu0 0.0
  %1580 = vmatpush1.msra.mxu0 0.0
  %1581 = vmatprep.subr.mxu0 0.0
  %1582 = vmatpush1.msra.mxu0 0.0
  %1583 = vmatprep.subr.mxu0 0.0
  %1584 = vmatpush1.msra.mxu0 0.0
  %1585 = vmatprep.subr.mxu0 0.0
  %1586 = vmatpush1.msra.mxu0 0.0
  %1587 = vmatprep.subr.mxu0 0.0
  %1588 = vmatpush1.msra.mxu0 0.0
  %1589 = vmatprep.subr.mxu0 0.0
  %1590 = vmatpush1.msra.mxu0 0.0
  %1591 = vmatprep.subr.mxu0 0.0
  %1592 = vmatpush1.msra.mxu0 0.0
  %1593 = vmatprep.subr.mxu0 0.0
  %1594 = vmatpush1.msra.mxu0 0.0
  %1595 = vmatprep.subr.mxu0 0.0
  %1596 = vmatpush1.msra.mxu0 0.0
  %1597 = vmatprep.subr.mxu0 0.0
  %1598 = vmatpush1.msra.mxu0 0.0
  %1599 = vmatprep.subr.mxu0 0.0
  %1600 = vmatpush1.msra.mxu0 0.0
  %1601 = vmatprep.subr.mxu0 0.0
  %1602 = vmatpush1.msra.mxu0 0.0
  %1603 = vmatprep.subr.mxu0 0.0
  %1604 = vmatpush1.msra.mxu0 0.0
  %1605 = vmatprep.subr.mxu0 0.0
  %1606 = vmatpush1.msra.mxu0 0.0
  %1607 = vmatprep.subr.mxu0 0.0
  %1608 = vmatpush1.msra.mxu0 0.0
  %1609 = vmatprep.subr.mxu0 0.0
  %1610 = vmatpush1.msra.mxu0 0.0
  %1611 = vmatprep.mubr.f32.mxu0 0.0
  %1612 = vmatmul.mubr.f32.gmra.mrb[0].mxu0 %v1462
  %v1613 = vpop.f32.mrb[0].mxu0
  %v1614 = vadd.f32 0.0, %v1613
  %v1615 = vpop.f32.mrb[0].mxu0
  %v1616 = vadd.f32 0.0, %v1615
  %1617 = vdwg.mxu0
  %v1622 = vcombine.low %v1543, %v1545
  %v1623 = vcombine.low %v1614, %v1616
  %v1626 = vadd.f32 %v896, %v1622
  %v1627 = vadd.f32 %v897, %v1623
  %v1628 = vmax.f32 %v1626, 0.0
  %v1629 = vmax.f32 %v1627, 0.0
  %1630 = vst [vmem:[%s4] sm:$0xff] %v1628
  %1631 = vst [vmem:[%s4 + $0x8] sm:$0xff] %v1629
  // Predicated region
  $region18: #{projnet_forward.1} parent=0 // pred_check
    _
  $region19: #{projnet_forward.1} parent=0 // pred_check_branch
    %1633 = sbr.rel (0) target = $region21
  $region20: #{projnet_forward.1} parent=0 // pred_region
    _
  $region21: #{projnet_forward.1} parent=0 // pred_fallthru
    _
  // Predicated region
  $region22: #{projnet_forward.1} parent=0 // pred_check
    _
  $region23: #{projnet_forward.1} parent=0 // pred_check_branch
    %1635 = sbr.rel (0) target = $region25
  $region24: #{projnet_forward.1} parent=0 // pred_region
    _
  $region25: #{projnet_forward.1} parent=0 // pred_fallthru
    _

</llo_original>
